<compile_context>
chip_gen: v7x
topology: tpu7x:2x2x1
jax: 0.10.0
libtpu: 0.0.40
codegen_flags: <defaults>
</compile_context>

<pallas_src>
import jax
import jax.numpy as jnp
from jax import lax
from jax.experimental import pallas as pl
from jax.experimental.pallas import tpu as pltpu

K_SRM = 5                       # SRM high-pass filter size
K_CONV = 5                      # nn.Conv2d(30, 3, (5, 5)) filter size
K_COMB = K_SRM + K_CONV - 1     # composed filter size (9)
BN_EPS = 1e-5                   # nn.BatchNorm2d default


def _compose_filters(srm_hwio, conv_w_hwio):
    """Compose SRM conv (5x5, Ci->M) with Conv2d (5x5, M->Co) into one 9x9 Ci->Co filter.

    Composition of two VALID cross-correlations is a cross-correlation with the
    full (spatially flipped) convolution of the two kernels, summed over M.
    srm_hwio: (5, 5, Ci, M), conv_w_hwio: (5, 5, M, Co) -> (9, 9, Ci, Co) HWIO.
    """
    kh2, kw2, _, _ = conv_w_hwio.shape
    lhs = jnp.transpose(srm_hwio, (2, 0, 1, 3))      # (Ci, 5, 5, M): Ci as batch, M as channels
    rhs = conv_w_hwio[::-1, ::-1, :, :]              # spatial flip -> full convolution
    comb = lax.conv_general_dilated(
        lhs, rhs, window_strides=(1, 1),
        padding=((kh2 - 1, kh2 - 1), (kw2 - 1, kw2 - 1)),
        dimension_numbers=('NHWC', 'HWIO', 'NHWC'))  # (Ci, 9, 9, Co)
    return jnp.transpose(comb, (1, 2, 0, 3))         # (9, 9, Ci, Co)


def _banded_weights(w_comb_hwio, w_in):
    """Channel-folded banded matrices: (KH, Ci*W, Co*Wo).

    B[i][c*W + vin, o*Wo + vout] = Wcomb[i, vin - vout, c, o] when 0 <= vin-vout < KW.
    A matmul of an input row-block (rows, Ci*W) with B[i] contracts over channels and
    the full W lane axis, realizing all KW horizontal taps and all Co outputs in one
    MXU op (lane-dense, no lane shifts / broadcasts inside the kernel).
    """
    kh, kw, ci, co = w_comb_hwio.shape
    wo = w_in - kw + 1
    wt = jnp.transpose(w_comb_hwio, (0, 2, 3, 1))                 # (KH, Ci, Co, KW)
    d = jnp.arange(w_in)[:, None] - jnp.arange(wo)[None, :]       # (W, Wo)
    valid = (d >= 0) & (d < kw)
    band = wt[..., jnp.clip(d, 0, kw - 1)]                        # (KH, Ci, Co, W, Wo)
    band = jnp.where(valid[None, None, None], band, 0.0)
    band = jnp.transpose(band, (0, 1, 3, 2, 4))                   # (KH, Ci, W, Co, Wo)
    return band.reshape(kh, ci * w_in, co * wo)                   # (KH, Ci*W, Co*Wo)


def _fp_kernel(x_ref, band_ref, gamma_ref, beta_ref, out_ref):
    """Single-step fused kernel: composed conv + BatchNorm + Hardtanh + (poor - rich).

    x_ref    : (2*N, H, Ci*W) f32  -- rows [0, N) are the poor branch, [N, 2N) rich
    band_ref : (KH, Ci*W, Co*Wo) f32 banded composed-conv weights
    gamma/beta : (Co,) f32 in SMEM (BatchNorm affine parameters)
    out_ref  : (N, Co, Ho, Wo) f32 fingerprint (NCHW)
    """
    two_n, h, ciw = x_ref.shape
    kh = band_ref.shape[0]
    n, co, ho, wo = out_ref.shape
    p = two_n * ho                 # total rows (both branches)
    pb = n * ho                    # rows per branch

    x = x_ref[...]                 # (2N, H, Ci*W)
    band = band_ref[...]           # (KH, Ci*W, Co*Wo)

    # Composed 9x9 VALID conv: one banded MXU matmul per vertical tap, both
    # branches and all output channels in the same matmul.
    acc = jnp.zeros((p, co * wo), jnp.float32)
    for i in range(kh):
        rows = x[:, i:i + ho, :].reshape(p, ciw)                  # (2N*Ho, Ci*W)
        acc = acc + jnp.dot(rows, band[i],
                            preferred_element_type=jnp.float32)   # (2N*Ho, Co*Wo)

    # BatchNorm2d (training mode: per-channel batch stats over (N, Ho, Wo), biased
    # variance) + Hardtanh, per branch, then fingerprint = poor - rich.
    # Conv bias omitted: it cancels exactly under the per-channel mean subtraction.
    inv_cnt = 1.0 / float(pb * wo)
    for o in range(co):
        ch = acc[:, o * wo:(o + 1) * wo]                          # (2N*Ho, Wo)

        def bn_hardtanh(a):
            mean = jnp.sum(a, keepdims=True) * inv_cnt            # (1, 1)
            cen = a - mean
            var = jnp.sum(cen * cen, keepdims=True) * inv_cnt     # (1, 1)
            y = cen * lax.rsqrt(var + BN_EPS) * gamma_ref[o] + beta_ref[o]
            return jnp.clip(y, -1.0, 1.0)

        fp = bn_hardtanh(ch[:pb]) - bn_hardtanh(ch[pb:])          # poor - rich
        out_ref[:, o, :, :] = fp.reshape(n, ho, wo)


@jax.jit
def fingerprint_forward(rich_nchw, poor_nchw, srm_hwio, conv_w_hwio, conv_b,
                        bn_gamma, bn_beta):
    # Conv2d bias is a per-channel constant -> exactly cancelled by BN mean subtraction.
    del conv_b

    n, ci, h, w = rich_nchw.shape
    ho, wo = h - K_COMB + 1, w - K_COMB + 1
    co = conv_w_hwio.shape[-1]

    w_comb = _compose_filters(srm_hwio.astype(jnp.float32),
                              conv_w_hwio.astype(jnp.float32))    # (9, 9, Ci, Co)
    band = _banded_weights(w_comb, w)                             # (9, Ci*W, Co*Wo)

    # Branch axis first: 0 = poor, 1 = rich (fingerprint = poor - rich).
    # Layout plumbing in the wrapper: fold Ci into the lane axis next to W.
    xs = jnp.stack([poor_nchw, rich_nchw]).astype(jnp.float32)    # (2, N, Ci, H, W)
    x2 = jnp.transpose(xs, (0, 1, 3, 2, 4)).reshape(2 * n, h, ci * w)  # (2N, H, Ci*W)

    return pl.pallas_call(
        _fp_kernel,
        out_shape=jax.ShapeDtypeStruct((n, co, ho, wo), jnp.float32),
        in_specs=[
            pl.BlockSpec(memory_space=pltpu.MemorySpace.VMEM),
            pl.BlockSpec(memory_space=pltpu.MemorySpace.VMEM),
            pl.BlockSpec(memory_space=pltpu.MemorySpace.SMEM),
            pl.BlockSpec(memory_space=pltpu.MemorySpace.SMEM),
        ],
        out_specs=pl.BlockSpec(memory_space=pltpu.MemorySpace.VMEM),
        compiler_params=pltpu.CompilerParams(vmem_limit_bytes=32 * 1024 * 1024),
    )(x2, band, bn_gamma.astype(jnp.float32), bn_beta.astype(jnp.float32))


def _reference(rich_nchw, poor_nchw, srm_hwio, conv_w_hwio, conv_b,
               bn_gamma, bn_beta):
    """Pure-JAX faithful emulation of the PyTorch module (two convs, with bias)."""
    def conv(x, w):
        return lax.conv_general_dilated(
            x, w, window_strides=(1, 1), padding='VALID',
            dimension_numbers=('NHWC', 'HWIO', 'NHWC'))

    def branch(x):
        f = conv(x, srm_hwio)
        y = conv(f, conv_w_hwio) + conv_b.reshape(1, 1, 1, -1)
        mean = jnp.mean(y, axis=(0, 1, 2), keepdims=True)
        var = jnp.mean((y - mean) ** 2, axis=(0, 1, 2), keepdims=True)
        y = (y - mean) * lax.rsqrt(var + BN_EPS) * bn_gamma.reshape(1, 1, 1, -1) \
            + bn_beta.reshape(1, 1, 1, -1)
        return jnp.clip(y, -1.0, 1.0)  # Hardtanh

    r = jnp.transpose(rich_nchw, (0, 2, 3, 1)).astype(jnp.float32)
    p = jnp.transpose(poor_nchw, (0, 2, 3, 1)).astype(jnp.float32)
    return jnp.transpose(branch(p) - branch(r), (0, 3, 1, 2))


if __name__ == "__main__":
    key = jax.random.PRNGKey(0)
    k_srm, k_cw, k_cb, k_rich, k_poor = jax.random.split(key, 5)

    # SRM_Kernels.npy has shape (5, 5, 1, 30); synthesize deterministically.
    # np.tile(kernels, (1,1,3,1)) -> (5,5,3,30); in HWIO layout that IS the filter
    # (PyTorch stacks/permutes it into the OIHW weight (30,3,5,5)).
    # TODO(synk): real SRM high-pass filter coefficients are not reproduced here.
    srm_base = jax.random.normal(k_srm, (5, 5, 1, 30), jnp.float32)
    srm_hwio = jnp.tile(srm_base, (1, 1, 3, 1))             # (5, 5, 3, 30)

    # nn.Conv2d(30, 3, (5, 5)) parameters (deterministic synthetic init)
    conv_w_oihw = 0.05 * jax.random.normal(k_cw, (3, 30, 5, 5), jnp.float32)
    conv_w_hwio = jnp.transpose(conv_w_oihw, (2, 3, 1, 0))  # (5, 5, 30, 3)
    conv_b = 0.05 * jax.random.normal(k_cb, (3,), jnp.float32)

    # nn.BatchNorm2d(3) affine parameters (PyTorch default init)
    bn_gamma = jnp.ones((3,), jnp.float32)
    bn_beta = jnp.zeros((3,), jnp.float32)

    # module inputs: NCHW patches, 3 channels (SRM filters expect 3)
    rich = jax.random.normal(k_rich, (2, 3, 16, 16), jnp.float32)
    poor = jax.random.normal(k_poor, (2, 3, 16, 16), jnp.float32)

    out = jax.block_until_ready(
        fingerprint_forward(rich, poor, srm_hwio, conv_w_hwio, conv_b,
                            bn_gamma, bn_beta))
    ref = jax.block_until_ready(
        _reference(rich, poor, srm_hwio, conv_w_hwio, conv_b,
                   bn_gamma, bn_beta))

    assert out.shape == (2, 3, 8, 8), out.shape
    assert jnp.allclose(out, ref, atol=1e-3, rtol=1e-3), \
        float(jnp.max(jnp.abs(out - ref)))
    print("KERNEL_OK")
</pallas_src>

<mosaic_0001>
module attributes {stable_mosaic.version = 11 : i64} {
  func.func @_fp_kernel(%arg0: memref<4x16x48xf32, #tpu.memory_space<vmem>>, %arg1: memref<9x48x24xf32, #tpu.memory_space<vmem>>, %arg2: memref<3xf32, #tpu.memory_space<smem>>, %arg3: memref<3xf32, #tpu.memory_space<smem>>, %arg4: memref<2x3x8x8xf32, #tpu.memory_space<vmem>>) attributes {dimension_semantics = [], scalar_prefetch = 0 : i64, scratch_operands = 0 : i64, tpu.core_type = #tpu.core_type<tc>} {
    %c0 = arith.constant 0 : index
    %c0_0 = arith.constant 0 : index
    %c0_1 = arith.constant 0 : index
    %0 = vector.load %arg0[%c0, %c0_0, %c0_1] : memref<4x16x48xf32, #tpu.memory_space<vmem>>, vector<4x16x48xf32>
    %c0_2 = arith.constant 0 : index
    %c0_3 = arith.constant 0 : index
    %c0_4 = arith.constant 0 : index
    %1 = vector.load %arg1[%c0_2, %c0_3, %c0_4] : memref<9x48x24xf32, #tpu.memory_space<vmem>>, vector<9x48x24xf32>
    %cst = arith.constant 0.000000e+00 : f32
    %2 = vector.broadcast %cst : f32 to vector<32x24xf32>
    %3 = vector.extract_strided_slice %0 {offsets = [0, 0, 0], sizes = [4, 8, 48], strides = [1, 1, 1]} : vector<4x16x48xf32> to vector<4x8x48xf32>
    %4 = vector.shape_cast %3 : vector<4x8x48xf32> to vector<32x48xf32>
    %5 = vector.extract_strided_slice %1 {offsets = [0, 0, 0], sizes = [1, 48, 24], strides = [1, 1, 1]} : vector<9x48x24xf32> to vector<1x48x24xf32>
    %6 = vector.shape_cast %5 : vector<1x48x24xf32> to vector<48x24xf32>
    %cst_5 = arith.constant dense<0.000000e+00> : vector<32x24xf32>
    %7 = tpu.matmul %4, %6, %cst_5 {dimension_numbers = #tpu.dot_dimension_numbers<[1], [0], [0], [1], [0, 0, 1, 1], [], []>} : vector<32x48xf32>, vector<48x24xf32>, vector<32x24xf32> -> vector<32x24xf32>
    %8 = arith.addf %2, %7 : vector<32x24xf32>
    %9 = vector.extract_strided_slice %0 {offsets = [0, 1, 0], sizes = [4, 8, 48], strides = [1, 1, 1]} : vector<4x16x48xf32> to vector<4x8x48xf32>
    %10 = vector.shape_cast %9 : vector<4x8x48xf32> to vector<32x48xf32>
    %11 = vector.extract_strided_slice %1 {offsets = [1, 0, 0], sizes = [1, 48, 24], strides = [1, 1, 1]} : vector<9x48x24xf32> to vector<1x48x24xf32>
    %12 = vector.shape_cast %11 : vector<1x48x24xf32> to vector<48x24xf32>
    %cst_6 = arith.constant dense<0.000000e+00> : vector<32x24xf32>
    %13 = tpu.matmul %10, %12, %cst_6 {dimension_numbers = #tpu.dot_dimension_numbers<[1], [0], [0], [1], [0, 0, 1, 1], [], []>} : vector<32x48xf32>, vector<48x24xf32>, vector<32x24xf32> -> vector<32x24xf32>
    %14 = arith.addf %8, %13 : vector<32x24xf32>
    %15 = vector.extract_strided_slice %0 {offsets = [0, 2, 0], sizes = [4, 8, 48], strides = [1, 1, 1]} : vector<4x16x48xf32> to vector<4x8x48xf32>
    %16 = vector.shape_cast %15 : vector<4x8x48xf32> to vector<32x48xf32>
    %17 = vector.extract_strided_slice %1 {offsets = [2, 0, 0], sizes = [1, 48, 24], strides = [1, 1, 1]} : vector<9x48x24xf32> to vector<1x48x24xf32>
    %18 = vector.shape_cast %17 : vector<1x48x24xf32> to vector<48x24xf32>
    %cst_7 = arith.constant dense<0.000000e+00> : vector<32x24xf32>
    %19 = tpu.matmul %16, %18, %cst_7 {dimension_numbers = #tpu.dot_dimension_numbers<[1], [0], [0], [1], [0, 0, 1, 1], [], []>} : vector<32x48xf32>, vector<48x24xf32>, vector<32x24xf32> -> vector<32x24xf32>
    %20 = arith.addf %14, %19 : vector<32x24xf32>
    %21 = vector.extract_strided_slice %0 {offsets = [0, 3, 0], sizes = [4, 8, 48], strides = [1, 1, 1]} : vector<4x16x48xf32> to vector<4x8x48xf32>
    %22 = vector.shape_cast %21 : vector<4x8x48xf32> to vector<32x48xf32>
    %23 = vector.extract_strided_slice %1 {offsets = [3, 0, 0], sizes = [1, 48, 24], strides = [1, 1, 1]} : vector<9x48x24xf32> to vector<1x48x24xf32>
    %24 = vector.shape_cast %23 : vector<1x48x24xf32> to vector<48x24xf32>
    %cst_8 = arith.constant dense<0.000000e+00> : vector<32x24xf32>
    %25 = tpu.matmul %22, %24, %cst_8 {dimension_numbers = #tpu.dot_dimension_numbers<[1], [0], [0], [1], [0, 0, 1, 1], [], []>} : vector<32x48xf32>, vector<48x24xf32>, vector<32x24xf32> -> vector<32x24xf32>
    %26 = arith.addf %20, %25 : vector<32x24xf32>
    %27 = vector.extract_strided_slice %0 {offsets = [0, 4, 0], sizes = [4, 8, 48], strides = [1, 1, 1]} : vector<4x16x48xf32> to vector<4x8x48xf32>
    %28 = vector.shape_cast %27 : vector<4x8x48xf32> to vector<32x48xf32>
    %29 = vector.extract_strided_slice %1 {offsets = [4, 0, 0], sizes = [1, 48, 24], strides = [1, 1, 1]} : vector<9x48x24xf32> to vector<1x48x24xf32>
    %30 = vector.shape_cast %29 : vector<1x48x24xf32> to vector<48x24xf32>
    %cst_9 = arith.constant dense<0.000000e+00> : vector<32x24xf32>
    %31 = tpu.matmul %28, %30, %cst_9 {dimension_numbers = #tpu.dot_dimension_numbers<[1], [0], [0], [1], [0, 0, 1, 1], [], []>} : vector<32x48xf32>, vector<48x24xf32>, vector<32x24xf32> -> vector<32x24xf32>
    %32 = arith.addf %26, %31 : vector<32x24xf32>
    %33 = vector.extract_strided_slice %0 {offsets = [0, 5, 0], sizes = [4, 8, 48], strides = [1, 1, 1]} : vector<4x16x48xf32> to vector<4x8x48xf32>
    %34 = vector.shape_cast %33 : vector<4x8x48xf32> to vector<32x48xf32>
    %35 = vector.extract_strided_slice %1 {offsets = [5, 0, 0], sizes = [1, 48, 24], strides = [1, 1, 1]} : vector<9x48x24xf32> to vector<1x48x24xf32>
    %36 = vector.shape_cast %35 : vector<1x48x24xf32> to vector<48x24xf32>
    %cst_10 = arith.constant dense<0.000000e+00> : vector<32x24xf32>
    %37 = tpu.matmul %34, %36, %cst_10 {dimension_numbers = #tpu.dot_dimension_numbers<[1], [0], [0], [1], [0, 0, 1, 1], [], []>} : vector<32x48xf32>, vector<48x24xf32>, vector<32x24xf32> -> vector<32x24xf32>
    %38 = arith.addf %32, %37 : vector<32x24xf32>
    %39 = vector.extract_strided_slice %0 {offsets = [0, 6, 0], sizes = [4, 8, 48], strides = [1, 1, 1]} : vector<4x16x48xf32> to vector<4x8x48xf32>
    %40 = vector.shape_cast %39 : vector<4x8x48xf32> to vector<32x48xf32>
    %41 = vector.extract_strided_slice %1 {offsets = [6, 0, 0], sizes = [1, 48, 24], strides = [1, 1, 1]} : vector<9x48x24xf32> to vector<1x48x24xf32>
    %42 = vector.shape_cast %41 : vector<1x48x24xf32> to vector<48x24xf32>
    %cst_11 = arith.constant dense<0.000000e+00> : vector<32x24xf32>
    %43 = tpu.matmul %40, %42, %cst_11 {dimension_numbers = #tpu.dot_dimension_numbers<[1], [0], [0], [1], [0, 0, 1, 1], [], []>} : vector<32x48xf32>, vector<48x24xf32>, vector<32x24xf32> -> vector<32x24xf32>
    %44 = arith.addf %38, %43 : vector<32x24xf32>
    %45 = vector.extract_strided_slice %0 {offsets = [0, 7, 0], sizes = [4, 8, 48], strides = [1, 1, 1]} : vector<4x16x48xf32> to vector<4x8x48xf32>
    %46 = vector.shape_cast %45 : vector<4x8x48xf32> to vector<32x48xf32>
    %47 = vector.extract_strided_slice %1 {offsets = [7, 0, 0], sizes = [1, 48, 24], strides = [1, 1, 1]} : vector<9x48x24xf32> to vector<1x48x24xf32>
    %48 = vector.shape_cast %47 : vector<1x48x24xf32> to vector<48x24xf32>
    %cst_12 = arith.constant dense<0.000000e+00> : vector<32x24xf32>
    %49 = tpu.matmul %46, %48, %cst_12 {dimension_numbers = #tpu.dot_dimension_numbers<[1], [0], [0], [1], [0, 0, 1, 1], [], []>} : vector<32x48xf32>, vector<48x24xf32>, vector<32x24xf32> -> vector<32x24xf32>
    %50 = arith.addf %44, %49 : vector<32x24xf32>
    %51 = vector.extract_strided_slice %0 {offsets = [0, 8, 0], sizes = [4, 8, 48], strides = [1, 1, 1]} : vector<4x16x48xf32> to vector<4x8x48xf32>
    %52 = vector.shape_cast %51 : vector<4x8x48xf32> to vector<32x48xf32>
    %53 = vector.extract_strided_slice %1 {offsets = [8, 0, 0], sizes = [1, 48, 24], strides = [1, 1, 1]} : vector<9x48x24xf32> to vector<1x48x24xf32>
    %54 = vector.shape_cast %53 : vector<1x48x24xf32> to vector<48x24xf32>
    %cst_13 = arith.constant dense<0.000000e+00> : vector<32x24xf32>
    %55 = tpu.matmul %52, %54, %cst_13 {dimension_numbers = #tpu.dot_dimension_numbers<[1], [0], [0], [1], [0, 0, 1, 1], [], []>} : vector<32x48xf32>, vector<48x24xf32>, vector<32x24xf32> -> vector<32x24xf32>
    %56 = arith.addf %50, %55 : vector<32x24xf32>
    %57 = vector.extract_strided_slice %56 {offsets = [0, 0], sizes = [32, 8], strides = [1, 1]} : vector<32x24xf32> to vector<32x8xf32>
    %58 = vector.extract_strided_slice %57 {offsets = [0, 0], sizes = [16, 8], strides = [1, 1]} : vector<32x8xf32> to vector<16x8xf32>
    %59 = vector.shape_cast %58 : vector<16x8xf32> to vector<1x16x8xf32>
    %cst_14 = arith.constant dense<0.000000e+00> : vector<1xf32>
    %60 = vector.multi_reduction <add>, %59, %cst_14 [1, 2] : vector<1x16x8xf32> to vector<1xf32>
    %61 = vector.shape_cast %60 : vector<1xf32> to vector<1x1x1xf32>
    %62 = vector.extract %61[0, 0, 0] : f32 from vector<1x1x1xf32>
    %63 = vector.broadcast %62 : f32 to vector<1x1xf32>
    %cst_15 = arith.constant 7.812500e-03 : f32
    %64 = vector.broadcast %cst_15 : f32 to vector<1x1xf32>
    %65 = arith.mulf %63, %64 : vector<1x1xf32>
    %66 = vector.broadcast %65 : vector<1x1xf32> to vector<16x8xf32>
    %67 = arith.subf %58, %66 : vector<16x8xf32>
    %68 = arith.mulf %67, %67 : vector<16x8xf32>
    %69 = vector.shape_cast %68 : vector<16x8xf32> to vector<1x16x8xf32>
    %cst_16 = arith.constant dense<0.000000e+00> : vector<1xf32>
    %70 = vector.multi_reduction <add>, %69, %cst_16 [1, 2] : vector<1x16x8xf32> to vector<1xf32>
    %71 = vector.shape_cast %70 : vector<1xf32> to vector<1x1x1xf32>
    %72 = vector.extract %71[0, 0, 0] : f32 from vector<1x1x1xf32>
    %73 = vector.broadcast %72 : f32 to vector<1x1xf32>
    %cst_17 = arith.constant 7.812500e-03 : f32
    %74 = vector.broadcast %cst_17 : f32 to vector<1x1xf32>
    %75 = arith.mulf %73, %74 : vector<1x1xf32>
    %cst_18 = arith.constant 9.99999974E-6 : f32
    %76 = vector.broadcast %cst_18 : f32 to vector<1x1xf32>
    %77 = arith.addf %75, %76 : vector<1x1xf32>
    %78 = math.rsqrt %77 : vector<1x1xf32>
    %79 = vector.broadcast %78 : vector<1x1xf32> to vector<16x8xf32>
    %80 = arith.mulf %67, %79 : vector<16x8xf32>
    %c0_19 = arith.constant 0 : index
    %81 = memref.load %arg2[%c0_19] : memref<3xf32, #tpu.memory_space<smem>>
    %82 = vector.broadcast %81 : f32 to vector<16x8xf32>
    %83 = arith.mulf %80, %82 : vector<16x8xf32>
    %c0_20 = arith.constant 0 : index
    %84 = memref.load %arg3[%c0_20] : memref<3xf32, #tpu.memory_space<smem>>
    %85 = vector.broadcast %84 : f32 to vector<16x8xf32>
    %86 = arith.addf %83, %85 : vector<16x8xf32>
    %cst_21 = arith.constant -1.000000e+00 : f32
    %cst_22 = arith.constant 1.000000e+00 : f32
    %87 = vector.broadcast %cst_21 : f32 to vector<16x8xf32>
    %88 = arith.maximumf %87, %86 : vector<16x8xf32>
    %89 = vector.broadcast %cst_22 : f32 to vector<16x8xf32>
    %90 = arith.minimumf %89, %88 : vector<16x8xf32>
    %91 = vector.extract_strided_slice %57 {offsets = [16, 0], sizes = [16, 8], strides = [1, 1]} : vector<32x8xf32> to vector<16x8xf32>
    %92 = vector.shape_cast %91 : vector<16x8xf32> to vector<1x16x8xf32>
    %cst_23 = arith.constant dense<0.000000e+00> : vector<1xf32>
    %93 = vector.multi_reduction <add>, %92, %cst_23 [1, 2] : vector<1x16x8xf32> to vector<1xf32>
    %94 = vector.shape_cast %93 : vector<1xf32> to vector<1x1x1xf32>
    %95 = vector.extract %94[0, 0, 0] : f32 from vector<1x1x1xf32>
    %96 = vector.broadcast %95 : f32 to vector<1x1xf32>
    %cst_24 = arith.constant 7.812500e-03 : f32
    %97 = vector.broadcast %cst_24 : f32 to vector<1x1xf32>
    %98 = arith.mulf %96, %97 : vector<1x1xf32>
    %99 = vector.broadcast %98 : vector<1x1xf32> to vector<16x8xf32>
    %100 = arith.subf %91, %99 : vector<16x8xf32>
    %101 = arith.mulf %100, %100 : vector<16x8xf32>
    %102 = vector.shape_cast %101 : vector<16x8xf32> to vector<1x16x8xf32>
    %cst_25 = arith.constant dense<0.000000e+00> : vector<1xf32>
    %103 = vector.multi_reduction <add>, %102, %cst_25 [1, 2] : vector<1x16x8xf32> to vector<1xf32>
    %104 = vector.shape_cast %103 : vector<1xf32> to vector<1x1x1xf32>
    %105 = vector.extract %104[0, 0, 0] : f32 from vector<1x1x1xf32>
    %106 = vector.broadcast %105 : f32 to vector<1x1xf32>
    %cst_26 = arith.constant 7.812500e-03 : f32
    %107 = vector.broadcast %cst_26 : f32 to vector<1x1xf32>
    %108 = arith.mulf %106, %107 : vector<1x1xf32>
    %cst_27 = arith.constant 9.99999974E-6 : f32
    %109 = vector.broadcast %cst_27 : f32 to vector<1x1xf32>
    %110 = arith.addf %108, %109 : vector<1x1xf32>
    %111 = math.rsqrt %110 : vector<1x1xf32>
    %112 = vector.broadcast %111 : vector<1x1xf32> to vector<16x8xf32>
    %113 = arith.mulf %100, %112 : vector<16x8xf32>
    %c0_28 = arith.constant 0 : index
    %114 = memref.load %arg2[%c0_28] : memref<3xf32, #tpu.memory_space<smem>>
    %115 = vector.broadcast %114 : f32 to vector<16x8xf32>
    %116 = arith.mulf %113, %115 : vector<16x8xf32>
    %c0_29 = arith.constant 0 : index
    %117 = memref.load %arg3[%c0_29] : memref<3xf32, #tpu.memory_space<smem>>
    %118 = vector.broadcast %117 : f32 to vector<16x8xf32>
    %119 = arith.addf %116, %118 : vector<16x8xf32>
    %cst_30 = arith.constant -1.000000e+00 : f32
    %cst_31 = arith.constant 1.000000e+00 : f32
    %120 = vector.broadcast %cst_30 : f32 to vector<16x8xf32>
    %121 = arith.maximumf %120, %119 : vector<16x8xf32>
    %122 = vector.broadcast %cst_31 : f32 to vector<16x8xf32>
    %123 = arith.minimumf %122, %121 : vector<16x8xf32>
    %124 = arith.subf %90, %123 : vector<16x8xf32>
    %125 = vector.shape_cast %124 : vector<16x8xf32> to vector<2x8x8xf32>
    %c0_32 = arith.constant 0 : index
    %c0_33 = arith.constant 0 : index
    %c0_34 = arith.constant 0 : index
    %c0_35 = arith.constant 0 : index
    %126 = vector.load %arg4[%c0_32, %c0_33, %c0_34, %c0_35] : memref<2x3x8x8xf32, #tpu.memory_space<vmem>>, vector<2x1x8x8xf32>
    %127 = vector.shape_cast %126 : vector<2x1x8x8xf32> to vector<2x8x8xf32>
    %128 = vector.shape_cast %125 : vector<2x8x8xf32> to vector<2x1x8x8xf32>
    tpu.vector_store %arg4[%c0_32, %c0_33, %c0_34, %c0_35], %128 {strides = array<i32>} : memref<2x3x8x8xf32, #tpu.memory_space<vmem>>, vector<2x1x8x8xf32>,
    %129 = vector.extract_strided_slice %56 {offsets = [0, 8], sizes = [32, 8], strides = [1, 1]} : vector<32x24xf32> to vector<32x8xf32>
    %130 = vector.extract_strided_slice %129 {offsets = [0, 0], sizes = [16, 8], strides = [1, 1]} : vector<32x8xf32> to vector<16x8xf32>
    %131 = vector.shape_cast %130 : vector<16x8xf32> to vector<1x16x8xf32>
    %cst_36 = arith.constant dense<0.000000e+00> : vector<1xf32>
    %132 = vector.multi_reduction <add>, %131, %cst_36 [1, 2] : vector<1x16x8xf32> to vector<1xf32>
    %133 = vector.shape_cast %132 : vector<1xf32> to vector<1x1x1xf32>
    %134 = vector.extract %133[0, 0, 0] : f32 from vector<1x1x1xf32>
    %135 = vector.broadcast %134 : f32 to vector<1x1xf32>
    %cst_37 = arith.constant 7.812500e-03 : f32
    %136 = vector.broadcast %cst_37 : f32 to vector<1x1xf32>
    %137 = arith.mulf %135, %136 : vector<1x1xf32>
    %138 = vector.broadcast %137 : vector<1x1xf32> to vector<16x8xf32>
    %139 = arith.subf %130, %138 : vector<16x8xf32>
    %140 = arith.mulf %139, %139 : vector<16x8xf32>
    %141 = vector.shape_cast %140 : vector<16x8xf32> to vector<1x16x8xf32>
    %cst_38 = arith.constant dense<0.000000e+00> : vector<1xf32>
    %142 = vector.multi_reduction <add>, %141, %cst_38 [1, 2] : vector<1x16x8xf32> to vector<1xf32>
    %143 = vector.shape_cast %142 : vector<1xf32> to vector<1x1x1xf32>
    %144 = vector.extract %143[0, 0, 0] : f32 from vector<1x1x1xf32>
    %145 = vector.broadcast %144 : f32 to vector<1x1xf32>
    %cst_39 = arith.constant 7.812500e-03 : f32
    %146 = vector.broadcast %cst_39 : f32 to vector<1x1xf32>
    %147 = arith.mulf %145, %146 : vector<1x1xf32>
    %cst_40 = arith.constant 9.99999974E-6 : f32
    %148 = vector.broadcast %cst_40 : f32 to vector<1x1xf32>
    %149 = arith.addf %147, %148 : vector<1x1xf32>
    %150 = math.rsqrt %149 : vector<1x1xf32>
    %151 = vector.broadcast %150 : vector<1x1xf32> to vector<16x8xf32>
    %152 = arith.mulf %139, %151 : vector<16x8xf32>
    %c1 = arith.constant 1 : index
    %153 = memref.load %arg2[%c1] : memref<3xf32, #tpu.memory_space<smem>>
    %154 = vector.broadcast %153 : f32 to vector<16x8xf32>
    %155 = arith.mulf %152, %154 : vector<16x8xf32>
    %c1_41 = arith.constant 1 : index
    %156 = memref.load %arg3[%c1_41] : memref<3xf32, #tpu.memory_space<smem>>
    %157 = vector.broadcast %156 : f32 to vector<16x8xf32>
    %158 = arith.addf %155, %157 : vector<16x8xf32>
    %cst_42 = arith.constant -1.000000e+00 : f32
    %cst_43 = arith.constant 1.000000e+00 : f32
    %159 = vector.broadcast %cst_42 : f32 to vector<16x8xf32>
    %160 = arith.maximumf %159, %158 : vector<16x8xf32>
    %161 = vector.broadcast %cst_43 : f32 to vector<16x8xf32>
    %162 = arith.minimumf %161, %160 : vector<16x8xf32>
    %163 = vector.extract_strided_slice %129 {offsets = [16, 0], sizes = [16, 8], strides = [1, 1]} : vector<32x8xf32> to vector<16x8xf32>
    %164 = vector.shape_cast %163 : vector<16x8xf32> to vector<1x16x8xf32>
    %cst_44 = arith.constant dense<0.000000e+00> : vector<1xf32>
    %165 = vector.multi_reduction <add>, %164, %cst_44 [1, 2] : vector<1x16x8xf32> to vector<1xf32>
    %166 = vector.shape_cast %165 : vector<1xf32> to vector<1x1x1xf32>
    %167 = vector.extract %166[0, 0, 0] : f32 from vector<1x1x1xf32>
    %168 = vector.broadcast %167 : f32 to vector<1x1xf32>
    %cst_45 = arith.constant 7.812500e-03 : f32
    %169 = vector.broadcast %cst_45 : f32 to vector<1x1xf32>
    %170 = arith.mulf %168, %169 : vector<1x1xf32>
    %171 = vector.broadcast %170 : vector<1x1xf32> to vector<16x8xf32>
    %172 = arith.subf %163, %171 : vector<16x8xf32>
    %173 = arith.mulf %172, %172 : vector<16x8xf32>
    %174 = vector.shape_cast %173 : vector<16x8xf32> to vector<1x16x8xf32>
    %cst_46 = arith.constant dense<0.000000e+00> : vector<1xf32>
    %175 = vector.multi_reduction <add>, %174, %cst_46 [1, 2] : vector<1x16x8xf32> to vector<1xf32>
    %176 = vector.shape_cast %175 : vector<1xf32> to vector<1x1x1xf32>
    %177 = vector.extract %176[0, 0, 0] : f32 from vector<1x1x1xf32>
    %178 = vector.broadcast %177 : f32 to vector<1x1xf32>
    %cst_47 = arith.constant 7.812500e-03 : f32
    %179 = vector.broadcast %cst_47 : f32 to vector<1x1xf32>
    %180 = arith.mulf %178, %179 : vector<1x1xf32>
    %cst_48 = arith.constant 9.99999974E-6 : f32
    %181 = vector.broadcast %cst_48 : f32 to vector<1x1xf32>
    %182 = arith.addf %180, %181 : vector<1x1xf32>
    %183 = math.rsqrt %182 : vector<1x1xf32>
    %184 = vector.broadcast %183 : vector<1x1xf32> to vector<16x8xf32>
    %185 = arith.mulf %172, %184 : vector<16x8xf32>
    %c1_49 = arith.constant 1 : index
    %186 = memref.load %arg2[%c1_49] : memref<3xf32, #tpu.memory_space<smem>>
    %187 = vector.broadcast %186 : f32 to vector<16x8xf32>
    %188 = arith.mulf %185, %187 : vector<16x8xf32>
    %c1_50 = arith.constant 1 : index
    %189 = memref.load %arg3[%c1_50] : memref<3xf32, #tpu.memory_space<smem>>
    %190 = vector.broadcast %189 : f32 to vector<16x8xf32>
    %191 = arith.addf %188, %190 : vector<16x8xf32>
    %cst_51 = arith.constant -1.000000e+00 : f32
    %cst_52 = arith.constant 1.000000e+00 : f32
    %192 = vector.broadcast %cst_51 : f32 to vector<16x8xf32>
    %193 = arith.maximumf %192, %191 : vector<16x8xf32>
    %194 = vector.broadcast %cst_52 : f32 to vector<16x8xf32>
    %195 = arith.minimumf %194, %193 : vector<16x8xf32>
    %196 = arith.subf %162, %195 : vector<16x8xf32>
    %197 = vector.shape_cast %196 : vector<16x8xf32> to vector<2x8x8xf32>
    %c0_53 = arith.constant 0 : index
    %c1_54 = arith.constant 1 : index
    %c0_55 = arith.constant 0 : index
    %c0_56 = arith.constant 0 : index
    %198 = vector.load %arg4[%c0_53, %c1_54, %c0_55, %c0_56] : memref<2x3x8x8xf32, #tpu.memory_space<vmem>>, vector<2x1x8x8xf32>
    %199 = vector.shape_cast %198 : vector<2x1x8x8xf32> to vector<2x8x8xf32>
    %200 = vector.shape_cast %197 : vector<2x8x8xf32> to vector<2x1x8x8xf32>
    tpu.vector_store %arg4[%c0_53, %c1_54, %c0_55, %c0_56], %200 {strides = array<i32>} : memref<2x3x8x8xf32, #tpu.memory_space<vmem>>, vector<2x1x8x8xf32>,
    %201 = vector.extract_strided_slice %56 {offsets = [0, 16], sizes = [32, 8], strides = [1, 1]} : vector<32x24xf32> to vector<32x8xf32>
    %202 = vector.extract_strided_slice %201 {offsets = [0, 0], sizes = [16, 8], strides = [1, 1]} : vector<32x8xf32> to vector<16x8xf32>
    %203 = vector.shape_cast %202 : vector<16x8xf32> to vector<1x16x8xf32>
    %cst_57 = arith.constant dense<0.000000e+00> : vector<1xf32>
    %204 = vector.multi_reduction <add>, %203, %cst_57 [1, 2] : vector<1x16x8xf32> to vector<1xf32>
    %205 = vector.shape_cast %204 : vector<1xf32> to vector<1x1x1xf32>
    %206 = vector.extract %205[0, 0, 0] : f32 from vector<1x1x1xf32>
    %207 = vector.broadcast %206 : f32 to vector<1x1xf32>
    %cst_58 = arith.constant 7.812500e-03 : f32
    %208 = vector.broadcast %cst_58 : f32 to vector<1x1xf32>
    %209 = arith.mulf %207, %208 : vector<1x1xf32>
    %210 = vector.broadcast %209 : vector<1x1xf32> to vector<16x8xf32>
    %211 = arith.subf %202, %210 : vector<16x8xf32>
    %212 = arith.mulf %211, %211 : vector<16x8xf32>
    %213 = vector.shape_cast %212 : vector<16x8xf32> to vector<1x16x8xf32>
    %cst_59 = arith.constant dense<0.000000e+00> : vector<1xf32>
    %214 = vector.multi_reduction <add>, %213, %cst_59 [1, 2] : vector<1x16x8xf32> to vector<1xf32>
    %215 = vector.shape_cast %214 : vector<1xf32> to vector<1x1x1xf32>
    %216 = vector.extract %215[0, 0, 0] : f32 from vector<1x1x1xf32>
    %217 = vector.broadcast %216 : f32 to vector<1x1xf32>
    %cst_60 = arith.constant 7.812500e-03 : f32
    %218 = vector.broadcast %cst_60 : f32 to vector<1x1xf32>
    %219 = arith.mulf %217, %218 : vector<1x1xf32>
    %cst_61 = arith.constant 9.99999974E-6 : f32
    %220 = vector.broadcast %cst_61 : f32 to vector<1x1xf32>
    %221 = arith.addf %219, %220 : vector<1x1xf32>
    %222 = math.rsqrt %221 : vector<1x1xf32>
    %223 = vector.broadcast %222 : vector<1x1xf32> to vector<16x8xf32>
    %224 = arith.mulf %211, %223 : vector<16x8xf32>
    %c2 = arith.constant 2 : index
    %225 = memref.load %arg2[%c2] : memref<3xf32, #tpu.memory_space<smem>>
    %226 = vector.broadcast %225 : f32 to vector<16x8xf32>
    %227 = arith.mulf %224, %226 : vector<16x8xf32>
    %c2_62 = arith.constant 2 : index
    %228 = memref.load %arg3[%c2_62] : memref<3xf32, #tpu.memory_space<smem>>
    %229 = vector.broadcast %228 : f32 to vector<16x8xf32>
    %230 = arith.addf %227, %229 : vector<16x8xf32>
    %cst_63 = arith.constant -1.000000e+00 : f32
    %cst_64 = arith.constant 1.000000e+00 : f32
    %231 = vector.broadcast %cst_63 : f32 to vector<16x8xf32>
    %232 = arith.maximumf %231, %230 : vector<16x8xf32>
    %233 = vector.broadcast %cst_64 : f32 to vector<16x8xf32>
    %234 = arith.minimumf %233, %232 : vector<16x8xf32>
    %235 = vector.extract_strided_slice %201 {offsets = [16, 0], sizes = [16, 8], strides = [1, 1]} : vector<32x8xf32> to vector<16x8xf32>
    %236 = vector.shape_cast %235 : vector<16x8xf32> to vector<1x16x8xf32>
    %cst_65 = arith.constant dense<0.000000e+00> : vector<1xf32>
    %237 = vector.multi_reduction <add>, %236, %cst_65 [1, 2] : vector<1x16x8xf32> to vector<1xf32>
    %238 = vector.shape_cast %237 : vector<1xf32> to vector<1x1x1xf32>
    %239 = vector.extract %238[0, 0, 0] : f32 from vector<1x1x1xf32>
    %240 = vector.broadcast %239 : f32 to vector<1x1xf32>
    %cst_66 = arith.constant 7.812500e-03 : f32
    %241 = vector.broadcast %cst_66 : f32 to vector<1x1xf32>
    %242 = arith.mulf %240, %241 : vector<1x1xf32>
    %243 = vector.broadcast %242 : vector<1x1xf32> to vector<16x8xf32>
    %244 = arith.subf %235, %243 : vector<16x8xf32>
    %245 = arith.mulf %244, %244 : vector<16x8xf32>
    %246 = vector.shape_cast %245 : vector<16x8xf32> to vector<1x16x8xf32>
    %cst_67 = arith.constant dense<0.000000e+00> : vector<1xf32>
    %247 = vector.multi_reduction <add>, %246, %cst_67 [1, 2] : vector<1x16x8xf32> to vector<1xf32>
    %248 = vector.shape_cast %247 : vector<1xf32> to vector<1x1x1xf32>
    %249 = vector.extract %248[0, 0, 0] : f32 from vector<1x1x1xf32>
    %250 = vector.broadcast %249 : f32 to vector<1x1xf32>
    %cst_68 = arith.constant 7.812500e-03 : f32
    %251 = vector.broadcast %cst_68 : f32 to vector<1x1xf32>
    %252 = arith.mulf %250, %251 : vector<1x1xf32>
    %cst_69 = arith.constant 9.99999974E-6 : f32
    %253 = vector.broadcast %cst_69 : f32 to vector<1x1xf32>
    %254 = arith.addf %252, %253 : vector<1x1xf32>
    %255 = math.rsqrt %254 : vector<1x1xf32>
    %256 = vector.broadcast %255 : vector<1x1xf32> to vector<16x8xf32>
    %257 = arith.mulf %244, %256 : vector<16x8xf32>
    %c2_70 = arith.constant 2 : index
    %258 = memref.load %arg2[%c2_70] : memref<3xf32, #tpu.memory_space<smem>>
    %259 = vector.broadcast %258 : f32 to vector<16x8xf32>
    %260 = arith.mulf %257, %259 : vector<16x8xf32>
    %c2_71 = arith.constant 2 : index
    %261 = memref.load %arg3[%c2_71] : memref<3xf32, #tpu.memory_space<smem>>
    %262 = vector.broadcast %261 : f32 to vector<16x8xf32>
    %263 = arith.addf %260, %262 : vector<16x8xf32>
    %cst_72 = arith.constant -1.000000e+00 : f32
    %cst_73 = arith.constant 1.000000e+00 : f32
    %264 = vector.broadcast %cst_72 : f32 to vector<16x8xf32>
    %265 = arith.maximumf %264, %263 : vector<16x8xf32>
    %266 = vector.broadcast %cst_73 : f32 to vector<16x8xf32>
    %267 = arith.minimumf %266, %265 : vector<16x8xf32>
    %268 = arith.subf %234, %267 : vector<16x8xf32>
    %269 = vector.shape_cast %268 : vector<16x8xf32> to vector<2x8x8xf32>
    %c0_74 = arith.constant 0 : index
    %c2_75 = arith.constant 2 : index
    %c0_76 = arith.constant 0 : index
    %c0_77 = arith.constant 0 : index
    %270 = vector.load %arg4[%c0_74, %c2_75, %c0_76, %c0_77] : memref<2x3x8x8xf32, #tpu.memory_space<vmem>>, vector<2x1x8x8xf32>
    %271 = vector.shape_cast %270 : vector<2x1x8x8xf32> to vector<2x8x8xf32>
    %272 = vector.shape_cast %269 : vector<2x8x8xf32> to vector<2x1x8x8xf32>
    tpu.vector_store %arg4[%c0_74, %c2_75, %c0_76, %c0_77], %272 {strides = array<i32>} : memref<2x3x8x8xf32, #tpu.memory_space<vmem>>, vector<2x1x8x8xf32>,
    return
  }
}

</mosaic_0001>

<llo_original>
// kernel: fingerprint_forward.1
$region0: #{fingerprint_forward.1}
  #allocation0 [shape = 'u32[]', space=smem, size = 0x4, offset = 0x4, fixed_abs, tag = 'smem constant byte address 0x4 - core index']
  #allocation1 [shape = 'u32[144,128]{1,0:T(1,128)}', space=vmem, size = 0x12000, scoped, tag = 'internal scratch']
  %s0 = inlined_call_operand.vmem [shape: f32[4,16,48], index: 0, kind: input, shape index: {}]
  %s1 = inlined_call_operand.vmem [shape: f32[9,48,24], index: 1, kind: input, shape index: {}]
  %s2 = inlined_call_operand.vmem [shape: f32[3], index: 2, kind: input, shape index: {}]
  %s3 = inlined_call_operand.vmem [shape: f32[3], index: 3, kind: input, shape index: {}]
  %s4 = inlined_call_operand.hbm [shape: f32[2,3,8,8], index: 4, kind: output, shape index: {}]
  %s5 = sld [smem:[#allocation0]]
  $region34: #{fingerprint_forward.1} parent=0
    _
  %s7 = ssub.s32 1, %s5
  %s8 = scalar_select 0, %s7, %s5
  $region1: #{fingerprint_forward.1} parent=0
    #allocation2 [shape = 'u8[512]{0}', space=smem, size = 0x200, scoped, tag = 'input window, operand 2, single buffered']
    #allocation3 [shape = 's32[1]{0}', space=sflag, size = 0x4, scoped, tag = 'scoped memory for fingerprint_forward.1']
    #allocation4 [shape = 's32[1]{0}', space=sflag, size = 0x4, scoped, tag = 'scoped memory for fingerprint_forward.1']
    #allocation5 [shape = 'u8[512]{0}', space=smem, size = 0x200, scoped, tag = 'input window, operand 3, single buffered']
    #allocation6 [shape = 's32[1]{0}', space=sflag, size = 0x4, scoped, tag = 'scoped memory for fingerprint_forward.1']
    #allocation7 [shape = 'u8[24576]{0}', space=vmem, size = 0x6000, scoped, tag = 'output window, operand 0, single buffered']
    %9 = vsyncpa [#allocation4], 0
    %10 = vsyncpa [#allocation6], 0
    %11 = vsyncpa [#allocation3], 0
    // Predicated region
    $region2: #{fingerprint_forward.1} parent=1 // pred_check
      _
    $region3: #{fingerprint_forward.1} parent=1 // pred_check_branch
      %13 = sbr.rel (0) target = $region5
    $region4: #{fingerprint_forward.1} parent=1 // pred_region
      _
    $region5: #{fingerprint_forward.1} parent=1 // pred_fallthru
      _
    // Predicated region
    $region6: #{fingerprint_forward.1} parent=1 // pred_check
      _
    $region7: #{fingerprint_forward.1} parent=1 // pred_check_branch
      %15 = sbr.rel (0) target = $region9
    $region8: #{fingerprint_forward.1} parent=1 // pred_region
      _
    $region9: #{fingerprint_forward.1} parent=1 // pred_fallthru
      _
    // Predicated region
    $region10: #{fingerprint_forward.1} parent=1 // pred_check
      _
    $region11: #{fingerprint_forward.1} parent=1 // pred_check_branch
      %17 = sbr.rel (0) target = $region13
    $region12: #{fingerprint_forward.1} parent=1 // pred_region
      %s19 = ssub.s32 16, 16
      %20 = vsyncadd [#allocation4], %s19
      %s22 = sshll.u32 %s2, 4
      %s23 = int_to_ptr.vmem [resolvable:$true] %s22
      %25 = dma.vmem_to_smem %s23, 16, [#allocation2], [#allocation4]
    $region13: #{fingerprint_forward.1} parent=1 // pred_fallthru
      _
    // Predicated region
    $region14: #{fingerprint_forward.1} parent=1 // pred_check
      _
    $region15: #{fingerprint_forward.1} parent=1 // pred_check_branch
      %27 = sbr.rel (0) target = $region17
    $region16: #{fingerprint_forward.1} parent=1 // pred_region
      %s29 = ssub.s32 16, 16
      %30 = vsyncadd [#allocation6], %s29
      %s32 = sshll.u32 %s3, 4
      %s33 = int_to_ptr.vmem [resolvable:$true] %s32
      %35 = dma.vmem_to_smem %s33, 16, [#allocation5], [#allocation6]
    $region17: #{fingerprint_forward.1} parent=1 // pred_fallthru
      _
    // Predicated region
    $region18: #{fingerprint_forward.1} parent=1 // pred_check
      _
    $region19: #{fingerprint_forward.1} parent=1 // pred_check_branch
      %37 = sbr.rel (0) target = $region21
    $region20: #{fingerprint_forward.1} parent=1 // pred_region
      %38 = dma.done [#allocation4], 16
    $region21: #{fingerprint_forward.1} parent=1 // pred_fallthru
      _
    // Predicated region
    $region22: #{fingerprint_forward.1} parent=1 // pred_check
      _
    $region23: #{fingerprint_forward.1} parent=1 // pred_check_branch
      %40 = sbr.rel (0) target = $region25
    $region24: #{fingerprint_forward.1} parent=1 // pred_region
      %41 = dma.done [#allocation6], 16
    $region25: #{fingerprint_forward.1} parent=1 // pred_fallthru
      _
    %42 = sfence
    %v43 = vld [vmem:[%s0] sm:$0xff]
    %v44 = vld [vmem:[%s0 + $0x8] sm:$0xff]
    %v45 = vld [vmem:[%s0 + $0x10] sm:$0xff]
    %v46 = vld [vmem:[%s0 + $0x18] sm:$0xff]
    %v47 = vld [vmem:[%s0 + $0x20] sm:$0xff]
    %v48 = vld [vmem:[%s0 + $0x28] sm:$0xff]
    %v49 = vld [vmem:[%s0 + $0x30] sm:$0xff]
    %v50 = vld [vmem:[%s0 + $0x38] sm:$0xff]
    %v51 = vld [vmem:[%s1] sm:$0xff]
    %v52 = vld [vmem:[%s1 + $0x8] sm:$0xff]
    %v53 = vld [vmem:[%s1 + $0x10] sm:$0xff]
    %v54 = vld [vmem:[%s1 + $0x18] sm:$0xff]
    %v55 = vld [vmem:[%s1 + $0x20] sm:$0xff]
    %v56 = vld [vmem:[%s1 + $0x28] sm:$0xff]
    %v57 = vld [vmem:[%s1 + $0x30] sm:$0xff]
    %v58 = vld [vmem:[%s1 + $0x38] sm:$0xff]
    %v59 = vld [vmem:[%s1 + $0x40] sm:$0xff]
    %v60 = vld [vmem:[%s1 + $0x48] sm:$0xff]
    %v61 = vld [vmem:[%s1 + $0x50] sm:$0xff]
    %v62 = vld [vmem:[%s1 + $0x58] sm:$0xff]
    %v63 = vld [vmem:[%s1 + $0x60] sm:$0xff]
    %v64 = vld [vmem:[%s1 + $0x68] sm:$0xff]
    %v65 = vld [vmem:[%s1 + $0x70] sm:$0xff]
    %v66 = vld [vmem:[%s1 + $0x78] sm:$0xff]
    %v67 = vld [vmem:[%s1 + $0x80] sm:$0xff]
    %v68 = vld [vmem:[%s1 + $0x88] sm:$0xff]
    %v69 = vld [vmem:[%s1 + $0x90] sm:$0xff]
    %v70 = vld [vmem:[%s1 + $0x98] sm:$0xff]
    %v71 = vld [vmem:[%s1 + $0xa0] sm:$0xff]
    %v72 = vld [vmem:[%s1 + $0xa8] sm:$0xff]
    %v73 = vld [vmem:[%s1 + $0xb0] sm:$0xff]
    %v74 = vld [vmem:[%s1 + $0xb8] sm:$0xff]
    %v75 = vld [vmem:[%s1 + $0xc0] sm:$0xff]
    %v76 = vld [vmem:[%s1 + $0xc8] sm:$0xff]
    %v77 = vld [vmem:[%s1 + $0xd0] sm:$0xff]
    %v78 = vld [vmem:[%s1 + $0xd8] sm:$0xff]
    %v79 = vld [vmem:[%s1 + $0xe0] sm:$0xff]
    %v80 = vld [vmem:[%s1 + $0xe8] sm:$0xff]
    %v81 = vld [vmem:[%s1 + $0xf0] sm:$0xff]
    %v82 = vld [vmem:[%s1 + $0xf8] sm:$0xff]
    %v83 = vld [vmem:[%s1 + $0x100] sm:$0xff]
    %v84 = vld [vmem:[%s1 + $0x108] sm:$0xff]
    %v85 = vld [vmem:[%s1 + $0x110] sm:$0xff]
    %v86 = vld [vmem:[%s1 + $0x118] sm:$0xff]
    %v87 = vld [vmem:[%s1 + $0x120] sm:$0xff]
    %v88 = vld [vmem:[%s1 + $0x128] sm:$0xff]
    %v89 = vld [vmem:[%s1 + $0x130] sm:$0xff]
    %v90 = vld [vmem:[%s1 + $0x138] sm:$0xff]
    %v91 = vld [vmem:[%s1 + $0x140] sm:$0xff]
    %v92 = vld [vmem:[%s1 + $0x148] sm:$0xff]
    %v93 = vld [vmem:[%s1 + $0x150] sm:$0xff]
    %v94 = vld [vmem:[%s1 + $0x158] sm:$0xff]
    %v95 = vld [vmem:[%s1 + $0x160] sm:$0xff]
    %v96 = vld [vmem:[%s1 + $0x168] sm:$0xff]
    %v97 = vld [vmem:[%s1 + $0x170] sm:$0xff]
    %v98 = vld [vmem:[%s1 + $0x178] sm:$0xff]
    %v99 = vld [vmem:[%s1 + $0x180] sm:$0xff]
    %v100 = vld [vmem:[%s1 + $0x188] sm:$0xff]
    %v101 = vld [vmem:[%s1 + $0x190] sm:$0xff]
    %v102 = vld [vmem:[%s1 + $0x198] sm:$0xff]
    %v103 = vld [vmem:[%s1 + $0x1a0] sm:$0xff]
    %v104 = vld [vmem:[%s1 + $0x1a8] sm:$0xff]
    %vm113 = vcmask 1046528
    %v114 = vrot.slane %v43, 1
    %v115 = vrot.slane %v44, 1
    %v116 = vsel %vm113, %v114, %v115
    %v117 = vrot.slane %v45, 1
    %v118 = vrot.slane %v46, 1
    %v119 = vsel %vm113, %v117, %v118
    %v120 = vrot.slane %v47, 1
    %v121 = vrot.slane %v48, 1
    %v122 = vsel %vm113, %v120, %v121
    %v123 = vrot.slane %v49, 1
    %v124 = vrot.slane %v50, 1
    %v125 = vsel %vm113, %v123, %v124
    %vm126 = vcmask 392192
    %v127 = vsel %vm126, %v116, 0
    %v129 = vsel %vm126, %v119, 0
    %v131 = vsel %vm126, %v122, 0
    %v133 = vsel %vm126, %v125, 0
    %135 = vmatprep.subr.mxu0 0.0
    %136 = vmatpush1.msra.mxu0 %v57
    %137 = vmatprep.subr.mxu0 0.0
    %138 = vmatpush1.msra.mxu0 %v58
    %139 = vmatprep.subr.mxu0 0.0
    %140 = vmatpush1.msra.mxu0 %v59
    %141 = vmatprep.subr.mxu0 0.0
    %142 = vmatpush1.msra.mxu0 %v60
    %143 = vmatprep.subr.mxu0 0.0
    %144 = vmatpush1.msra.mxu0 %v61
    %145 = vmatprep.subr.mxu0 0.0
    %146 = vmatpush1.msra.mxu0 %v62
    %147 = vmatprep.subr.mxu0 0.0
    %148 = vmatpush1.msra.mxu0 0.0
    %149 = vmatprep.subr.mxu0 0.0
    %150 = vmatpush1.msra.mxu0 0.0
    %151 = vmatprep.subr.mxu0 0.0
    %152 = vmatpush1.msra.mxu0 0.0
    %153 = vmatprep.subr.mxu0 0.0
    %154 = vmatpush1.msra.mxu0 0.0
    %155 = vmatprep.subr.mxu0 0.0
    %156 = vmatpush1.msra.mxu0 0.0
    %157 = vmatprep.subr.mxu0 0.0
    %158 = vmatpush1.msra.mxu0 0.0
    %159 = vmatprep.subr.mxu0 0.0
    %160 = vmatpush1.msra.mxu0 0.0
    %161 = vmatprep.subr.mxu0 0.0
    %162 = vmatpush1.msra.mxu0 0.0
    %163 = vmatprep.subr.mxu0 0.0
    %164 = vmatpush1.msra.mxu0 0.0
    %165 = vmatprep.subr.mxu0 0.0
    %166 = vmatpush1.msra.mxu0 0.0
    %167 = vmatprep.subr.mxu0 0.0
    %168 = vmatpush1.msra.mxu0 0.0
    %169 = vmatprep.subr.mxu0 0.0
    %170 = vmatpush1.msra.mxu0 0.0
    %171 = vmatprep.subr.mxu0 0.0
    %172 = vmatpush1.msra.mxu0 0.0
    %173 = vmatprep.subr.mxu0 0.0
    %174 = vmatpush1.msra.mxu0 0.0
    %175 = vmatprep.subr.mxu0 0.0
    %176 = vmatpush1.msra.mxu0 0.0
    %177 = vmatprep.subr.mxu0 0.0
    %178 = vmatpush1.msra.mxu0 0.0
    %179 = vmatprep.subr.mxu0 0.0
    %180 = vmatpush1.msra.mxu0 0.0
    %181 = vmatprep.subr.mxu0 0.0
    %182 = vmatpush1.msra.mxu0 0.0
    %183 = vmatprep.subr.mxu0 0.0
    %184 = vmatpush1.msra.mxu0 0.0
    %185 = vmatprep.subr.mxu0 0.0
    %186 = vmatpush1.msra.mxu0 0.0
    %187 = vmatprep.subr.mxu0 0.0
    %188 = vmatpush1.msra.mxu0 0.0
    %189 = vmatprep.subr.mxu0 0.0
    %190 = vmatpush1.msra.mxu0 0.0
    %191 = vmatprep.subr.mxu0 0.0
    %192 = vmatpush1.msra.mxu0 0.0
    %193 = vmatprep.subr.mxu0 0.0
    %194 = vmatpush1.msra.mxu0 0.0
    %195 = vmatprep.subr.mxu0 0.0
    %196 = vmatpush1.msra.mxu0 0.0
    %197 = vmatprep.subr.mxu0 0.0
    %198 = vmatpush1.msra.mxu0 0.0
    %199 = vmatprep.mubr.f32.mxu0 0.0
    %200 = vmatmul.mubr.f32.gmra.mrb[0].mxu0 %v127
    %v201 = vpop.f32.mrb[0].mxu0
    %v202 = vadd.f32 0.0, %v201
    %v203 = vpop.f32.mrb[0].mxu0
    %204 = vmatprep.mubr.f32.mxu0 0.0
    %205 = vmatmul.mubr.f32.gmra.mrb[0].mxu0 %v129
    %v206 = vpop.f32.mrb[0].mxu0
    %v207 = vadd.f32 0.0, %v206
    %v208 = vpop.f32.mrb[0].mxu0
    %209 = vmatprep.mubr.f32.mxu0 0.0
    %210 = vmatmul.mubr.f32.gmra.mrb[0].mxu0 %v131
    %v211 = vpop.f32.mrb[0].mxu0
    %v212 = vadd.f32 0.0, %v211
    %v213 = vpop.f32.mrb[0].mxu0
    %214 = vmatprep.mubr.f32.mxu0 0.0
    %215 = vmatmul.mubr.f32.gmra.mrb[0].mxu0 %v133
    %v216 = vpop.f32.mrb[0].mxu0
    %v217 = vadd.f32 0.0, %v216
    %v218 = vpop.f32.mrb[0].mxu0
    %219 = vdwg.mxu0
    %v220 = vsel %vm126, %v43, 0
    %v222 = vsel %vm126, %v45, 0
    %v224 = vsel %vm126, %v47, 0
    %v226 = vsel %vm126, %v49, 0
    %228 = vmatprep.subr.mxu0 0.0
    %229 = vmatpush1.msra.mxu0 %v51
    %230 = vmatprep.subr.mxu0 0.0
    %231 = vmatpush1.msra.mxu0 %v52
    %232 = vmatprep.subr.mxu0 0.0
    %233 = vmatpush1.msra.mxu0 %v53
    %234 = vmatprep.subr.mxu0 0.0
    %235 = vmatpush1.msra.mxu0 %v54
    %236 = vmatprep.subr.mxu0 0.0
    %237 = vmatpush1.msra.mxu0 %v55
    %238 = vmatprep.subr.mxu0 0.0
    %239 = vmatpush1.msra.mxu0 %v56
    %240 = vmatprep.subr.mxu0 0.0
    %241 = vmatpush1.msra.mxu0 0.0
    %242 = vmatprep.subr.mxu0 0.0
    %243 = vmatpush1.msra.mxu0 0.0
    %244 = vmatprep.subr.mxu0 0.0
    %245 = vmatpush1.msra.mxu0 0.0
    %246 = vmatprep.subr.mxu0 0.0
    %247 = vmatpush1.msra.mxu0 0.0
    %248 = vmatprep.subr.mxu0 0.0
    %249 = vmatpush1.msra.mxu0 0.0
    %250 = vmatprep.subr.mxu0 0.0
    %251 = vmatpush1.msra.mxu0 0.0
    %252 = vmatprep.subr.mxu0 0.0
    %253 = vmatpush1.msra.mxu0 0.0
    %254 = vmatprep.subr.mxu0 0.0
    %255 = vmatpush1.msra.mxu0 0.0
    %256 = vmatprep.subr.mxu0 0.0
    %257 = vmatpush1.msra.mxu0 0.0
    %258 = vmatprep.subr.mxu0 0.0
    %259 = vmatpush1.msra.mxu0 0.0
    %260 = vmatprep.subr.mxu0 0.0
    %261 = vmatpush1.msra.mxu0 0.0
    %262 = vmatprep.subr.mxu0 0.0
    %263 = vmatpush1.msra.mxu0 0.0
    %264 = vmatprep.subr.mxu0 0.0
    %265 = vmatpush1.msra.mxu0 0.0
    %266 = vmatprep.subr.mxu0 0.0
    %267 = vmatpush1.msra.mxu0 0.0
    %268 = vmatprep.subr.mxu0 0.0
    %269 = vmatpush1.msra.mxu0 0.0
    %270 = vmatprep.subr.mxu0 0.0
    %271 = vmatpush1.msra.mxu0 0.0
    %272 = vmatprep.subr.mxu0 0.0
    %273 = vmatpush1.msra.mxu0 0.0
    %274 = vmatprep.subr.mxu0 0.0
    %275 = vmatpush1.msra.mxu0 0.0
    %276 = vmatprep.subr.mxu0 0.0
    %277 = vmatpush1.msra.mxu0 0.0
    %278 = vmatprep.subr.mxu0 0.0
    %279 = vmatpush1.msra.mxu0 0.0
    %280 = vmatprep.subr.mxu0 0.0
    %281 = vmatpush1.msra.mxu0 0.0
    %282 = vmatprep.subr.mxu0 0.0
    %283 = vmatpush1.msra.mxu0 0.0
    %284 = vmatprep.subr.mxu0 0.0
    %285 = vmatpush1.msra.mxu0 0.0
    %286 = vmatprep.subr.mxu0 0.0
    %287 = vmatpush1.msra.mxu0 0.0
    %288 = vmatprep.subr.mxu0 0.0
    %289 = vmatpush1.msra.mxu0 0.0
    %290 = vmatprep.subr.mxu0 0.0
    %291 = vmatpush1.msra.mxu0 0.0
    %292 = vmatprep.mubr.f32.mxu0 0.0
    %293 = vmatmul.mubr.f32.gmra.mrb[0].mxu0 %v220
    %v294 = vpop.f32.mrb[0].mxu0
    %v295 = vadd.f32 %v202, %v294
    %v296 = vpop.f32.mrb[0].mxu0
    %297 = vmatprep.mubr.f32.mxu0 0.0
    %298 = vmatmul.mubr.f32.gmra.mrb[0].mxu0 %v222
    %v299 = vpop.f32.mrb[0].mxu0
    %v300 = vadd.f32 %v207, %v299
    %v301 = vpop.f32.mrb[0].mxu0
    %302 = vmatprep.mubr.f32.mxu0 0.0
    %303 = vmatmul.mubr.f32.gmra.mrb[0].mxu0 %v224
    %v304 = vpop.f32.mrb[0].mxu0
    %v305 = vadd.f32 %v212, %v304
    %v306 = vpop.f32.mrb[0].mxu0
    %307 = vmatprep.mubr.f32.mxu0 0.0
    %308 = vmatmul.mubr.f32.gmra.mrb[0].mxu0 %v226
    %v309 = vpop.f32.mrb[0].mxu0
    %v310 = vadd.f32 %v217, %v309
    %v311 = vpop.f32.mrb[0].mxu0
    %312 = vdwg.mxu0
    %vm313 = vcmask 1045504
    %v314 = vrot.slane %v43, 2
    %v315 = vrot.slane %v44, 2
    %v316 = vsel %vm313, %v314, %v315
    %v317 = vrot.slane %v45, 2
    %v318 = vrot.slane %v46, 2
    %v319 = vsel %vm313, %v317, %v318
    %v320 = vrot.slane %v47, 2
    %v321 = vrot.slane %v48, 2
    %v322 = vsel %vm313, %v320, %v321
    %v323 = vrot.slane %v49, 2
    %v324 = vrot.slane %v50, 2
    %v325 = vsel %vm313, %v323, %v324
    %v326 = vsel %vm126, %v316, 0
    %v328 = vsel %vm126, %v319, 0
    %v330 = vsel %vm126, %v322, 0
    %v332 = vsel %vm126, %v325, 0
    %334 = vmatprep.subr.mxu0 0.0
    %335 = vmatpush1.msra.mxu0 %v63
    %336 = vmatprep.subr.mxu0 0.0
    %337 = vmatpush1.msra.mxu0 %v64
    %338 = vmatprep.subr.mxu0 0.0
    %339 = vmatpush1.msra.mxu0 %v65
    %340 = vmatprep.subr.mxu0 0.0
    %341 = vmatpush1.msra.mxu0 %v66
    %342 = vmatprep.subr.mxu0 0.0
    %343 = vmatpush1.msra.mxu0 %v67
    %344 = vmatprep.subr.mxu0 0.0
    %345 = vmatpush1.msra.mxu0 %v68
    %346 = vmatprep.subr.mxu0 0.0
    %347 = vmatpush1.msra.mxu0 0.0
    %348 = vmatprep.subr.mxu0 0.0
    %349 = vmatpush1.msra.mxu0 0.0
    %350 = vmatprep.subr.mxu0 0.0
    %351 = vmatpush1.msra.mxu0 0.0
    %352 = vmatprep.subr.mxu0 0.0
    %353 = vmatpush1.msra.mxu0 0.0
    %354 = vmatprep.subr.mxu0 0.0
    %355 = vmatpush1.msra.mxu0 0.0
    %356 = vmatprep.subr.mxu0 0.0
    %357 = vmatpush1.msra.mxu0 0.0
    %358 = vmatprep.subr.mxu0 0.0
    %359 = vmatpush1.msra.mxu0 0.0
    %360 = vmatprep.subr.mxu0 0.0
    %361 = vmatpush1.msra.mxu0 0.0
    %362 = vmatprep.subr.mxu0 0.0
    %363 = vmatpush1.msra.mxu0 0.0
    %364 = vmatprep.subr.mxu0 0.0
    %365 = vmatpush1.msra.mxu0 0.0
    %366 = vmatprep.subr.mxu0 0.0
    %367 = vmatpush1.msra.mxu0 0.0
    %368 = vmatprep.subr.mxu0 0.0
    %369 = vmatpush1.msra.mxu0 0.0
    %370 = vmatprep.subr.mxu0 0.0
    %371 = vmatpush1.msra.mxu0 0.0
    %372 = vmatprep.subr.mxu0 0.0
    %373 = vmatpush1.msra.mxu0 0.0
    %374 = vmatprep.subr.mxu0 0.0
    %375 = vmatpush1.msra.mxu0 0.0
    %376 = vmatprep.subr.mxu0 0.0
    %377 = vmatpush1.msra.mxu0 0.0
    %378 = vmatprep.subr.mxu0 0.0
    %379 = vmatpush1.msra.mxu0 0.0
    %380 = vmatprep.subr.mxu0 0.0
    %381 = vmatpush1.msra.mxu0 0.0
    %382 = vmatprep.subr.mxu0 0.0
    %383 = vmatpush1.msra.mxu0 0.0
    %384 = vmatprep.subr.mxu0 0.0
    %385 = vmatpush1.msra.mxu0 0.0
    %386 = vmatprep.subr.mxu0 0.0
    %387 = vmatpush1.msra.mxu0 0.0
    %388 = vmatprep.subr.mxu0 0.0
    %389 = vmatpush1.msra.mxu0 0.0
    %390 = vmatprep.subr.mxu0 0.0
    %391 = vmatpush1.msra.mxu0 0.0
    %392 = vmatprep.subr.mxu0 0.0
    %393 = vmatpush1.msra.mxu0 0.0
    %394 = vmatprep.subr.mxu0 0.0
    %395 = vmatpush1.msra.mxu0 0.0
    %396 = vmatprep.subr.mxu0 0.0
    %397 = vmatpush1.msra.mxu0 0.0
    %398 = vmatprep.mubr.f32.mxu0 0.0
    %399 = vmatmul.mubr.f32.gmra.mrb[0].mxu0 %v326
    %v400 = vpop.f32.mrb[0].mxu0
    %v401 = vadd.f32 0.0, %v400
    %v402 = vpop.f32.mrb[0].mxu0
    %403 = vmatprep.mubr.f32.mxu0 0.0
    %404 = vmatmul.mubr.f32.gmra.mrb[0].mxu0 %v328
    %v405 = vpop.f32.mrb[0].mxu0
    %v406 = vadd.f32 0.0, %v405
    %v407 = vpop.f32.mrb[0].mxu0
    %408 = vmatprep.mubr.f32.mxu0 0.0
    %409 = vmatmul.mubr.f32.gmra.mrb[0].mxu0 %v330
    %v410 = vpop.f32.mrb[0].mxu0
    %v411 = vadd.f32 0.0, %v410
    %v412 = vpop.f32.mrb[0].mxu0
    %413 = vmatprep.mubr.f32.mxu0 0.0
    %414 = vmatmul.mubr.f32.gmra.mrb[0].mxu0 %v332
    %v415 = vpop.f32.mrb[0].mxu0
    %v416 = vadd.f32 0.0, %v415
    %v417 = vpop.f32.mrb[0].mxu0
    %418 = vdwg.mxu0
    %v419 = vadd.f32 %v295, %v401
    %v420 = vadd.f32 %v300, %v406
    %v421 = vadd.f32 %v305, %v411
    %v422 = vadd.f32 %v310, %v416
    %vm423 = vcmask 1044480
    %v424 = vrot.slane %v43, 3
    %v425 = vrot.slane %v44, 3
    %v426 = vsel %vm423, %v424, %v425
    %v427 = vrot.slane %v45, 3
    %v428 = vrot.slane %v46, 3
    %v429 = vsel %vm423, %v427, %v428
    %v430 = vrot.slane %v47, 3
    %v431 = vrot.slane %v48, 3
    %v432 = vsel %vm423, %v430, %v431
    %v433 = vrot.slane %v49, 3
    %v434 = vrot.slane %v50, 3
    %v435 = vsel %vm423, %v433, %v434
    %v436 = vsel %vm126, %v426, 0
    %v438 = vsel %vm126, %v429, 0
    %v440 = vsel %vm126, %v432, 0
    %v442 = vsel %vm126, %v435, 0
    %444 = vmatprep.subr.mxu0 0.0
    %445 = vmatpush1.msra.mxu0 %v69
    %446 = vmatprep.subr.mxu0 0.0
    %447 = vmatpush1.msra.mxu0 %v70
    %448 = vmatprep.subr.mxu0 0.0
    %449 = vmatpush1.msra.mxu0 %v71
    %450 = vmatprep.subr.mxu0 0.0
    %451 = vmatpush1.msra.mxu0 %v72
    %452 = vmatprep.subr.mxu0 0.0
    %453 = vmatpush1.msra.mxu0 %v73
    %454 = vmatprep.subr.mxu0 0.0
    %455 = vmatpush1.msra.mxu0 %v74
    %456 = vmatprep.subr.mxu0 0.0
    %457 = vmatpush1.msra.mxu0 0.0
    %458 = vmatprep.subr.mxu0 0.0
    %459 = vmatpush1.msra.mxu0 0.0
    %460 = vmatprep.subr.mxu0 0.0
    %461 = vmatpush1.msra.mxu0 0.0
    %462 = vmatprep.subr.mxu0 0.0
    %463 = vmatpush1.msra.mxu0 0.0
    %464 = vmatprep.subr.mxu0 0.0
    %465 = vmatpush1.msra.mxu0 0.0
    %466 = vmatprep.subr.mxu0 0.0
    %467 = vmatpush1.msra.mxu0 0.0
    %468 = vmatprep.subr.mxu0 0.0
    %469 = vmatpush1.msra.mxu0 0.0
    %470 = vmatprep.subr.mxu0 0.0
    %471 = vmatpush1.msra.mxu0 0.0
    %472 = vmatprep.subr.mxu0 0.0
    %473 = vmatpush1.msra.mxu0 0.0
    %474 = vmatprep.subr.mxu0 0.0
    %475 = vmatpush1.msra.mxu0 0.0
    %476 = vmatprep.subr.mxu0 0.0
    %477 = vmatpush1.msra.mxu0 0.0
    %478 = vmatprep.subr.mxu0 0.0
    %479 = vmatpush1.msra.mxu0 0.0
    %480 = vmatprep.subr.mxu0 0.0
    %481 = vmatpush1.msra.mxu0 0.0
    %482 = vmatprep.subr.mxu0 0.0
    %483 = vmatpush1.msra.mxu0 0.0
    %484 = vmatprep.subr.mxu0 0.0
    %485 = vmatpush1.msra.mxu0 0.0
    %486 = vmatprep.subr.mxu0 0.0
    %487 = vmatpush1.msra.mxu0 0.0
    %488 = vmatprep.subr.mxu0 0.0
    %489 = vmatpush1.msra.mxu0 0.0
    %490 = vmatprep.subr.mxu0 0.0
    %491 = vmatpush1.msra.mxu0 0.0
    %492 = vmatprep.subr.mxu0 0.0
    %493 = vmatpush1.msra.mxu0 0.0
    %494 = vmatprep.subr.mxu0 0.0
    %495 = vmatpush1.msra.mxu0 0.0
    %496 = vmatprep.subr.mxu0 0.0
    %497 = vmatpush1.msra.mxu0 0.0
    %498 = vmatprep.subr.mxu0 0.0
    %499 = vmatpush1.msra.mxu0 0.0
    %500 = vmatprep.subr.mxu0 0.0
    %501 = vmatpush1.msra.mxu0 0.0
    %502 = vmatprep.subr.mxu0 0.0
    %503 = vmatpush1.msra.mxu0 0.0
    %504 = vmatprep.subr.mxu0 0.0
    %505 = vmatpush1.msra.mxu0 0.0
    %506 = vmatprep.subr.mxu0 0.0
    %507 = vmatpush1.msra.mxu0 0.0
    %508 = vmatprep.mubr.f32.mxu0 0.0
    %509 = vmatmul.mubr.f32.gmra.mrb[0].mxu0 %v436
    %v510 = vpop.f32.mrb[0].mxu0
    %v511 = vadd.f32 0.0, %v510
    %v512 = vpop.f32.mrb[0].mxu0
    %513 = vmatprep.mubr.f32.mxu0 0.0
    %514 = vmatmul.mubr.f32.gmra.mrb[0].mxu0 %v438
    %v515 = vpop.f32.mrb[0].mxu0
    %v516 = vadd.f32 0.0, %v515
    %v517 = vpop.f32.mrb[0].mxu0
    %518 = vmatprep.mubr.f32.mxu0 0.0
    %519 = vmatmul.mubr.f32.gmra.mrb[0].mxu0 %v440
    %v520 = vpop.f32.mrb[0].mxu0
    %v521 = vadd.f32 0.0, %v520
    %v522 = vpop.f32.mrb[0].mxu0
    %523 = vmatprep.mubr.f32.mxu0 0.0
    %524 = vmatmul.mubr.f32.gmra.mrb[0].mxu0 %v442
    %v525 = vpop.f32.mrb[0].mxu0
    %v526 = vadd.f32 0.0, %v525
    %v527 = vpop.f32.mrb[0].mxu0
    %528 = vdwg.mxu0
    %v529 = vadd.f32 %v419, %v511
    %v530 = vadd.f32 %v420, %v516
    %v531 = vadd.f32 %v421, %v521
    %v532 = vadd.f32 %v422, %v526
    %vm533 = vcmask 1043456
    %v534 = vrot.slane %v43, 4
    %v535 = vrot.slane %v44, 4
    %v536 = vsel %vm533, %v534, %v535
    %v537 = vrot.slane %v45, 4
    %v538 = vrot.slane %v46, 4
    %v539 = vsel %vm533, %v537, %v538
    %v540 = vrot.slane %v47, 4
    %v541 = vrot.slane %v48, 4
    %v542 = vsel %vm533, %v540, %v541
    %v543 = vrot.slane %v49, 4
    %v544 = vrot.slane %v50, 4
    %v545 = vsel %vm533, %v543, %v544
    %v546 = vsel %vm126, %v536, 0
    %v548 = vsel %vm126, %v539, 0
    %v550 = vsel %vm126, %v542, 0
    %v552 = vsel %vm126, %v545, 0
    %554 = vmatprep.subr.mxu0 0.0
    %555 = vmatpush1.msra.mxu0 %v75
    %556 = vmatprep.subr.mxu0 0.0
    %557 = vmatpush1.msra.mxu0 %v76
    %558 = vmatprep.subr.mxu0 0.0
    %559 = vmatpush1.msra.mxu0 %v77
    %560 = vmatprep.subr.mxu0 0.0
    %561 = vmatpush1.msra.mxu0 %v78
    %562 = vmatprep.subr.mxu0 0.0
    %563 = vmatpush1.msra.mxu0 %v79
    %564 = vmatprep.subr.mxu0 0.0
    %565 = vmatpush1.msra.mxu0 %v80
    %566 = vmatprep.subr.mxu0 0.0
    %567 = vmatpush1.msra.mxu0 0.0
    %568 = vmatprep.subr.mxu0 0.0
    %569 = vmatpush1.msra.mxu0 0.0
    %570 = vmatprep.subr.mxu0 0.0
    %571 = vmatpush1.msra.mxu0 0.0
    %572 = vmatprep.subr.mxu0 0.0
    %573 = vmatpush1.msra.mxu0 0.0
    %574 = vmatprep.subr.mxu0 0.0
    %575 = vmatpush1.msra.mxu0 0.0
    %576 = vmatprep.subr.mxu0 0.0
    %577 = vmatpush1.msra.mxu0 0.0
    %578 = vmatprep.subr.mxu0 0.0
    %579 = vmatpush1.msra.mxu0 0.0
    %580 = vmatprep.subr.mxu0 0.0
    %581 = vmatpush1.msra.mxu0 0.0
    %582 = vmatprep.subr.mxu0 0.0
    %583 = vmatpush1.msra.mxu0 0.0
    %584 = vmatprep.subr.mxu0 0.0
    %585 = vmatpush1.msra.mxu0 0.0
    %586 = vmatprep.subr.mxu0 0.0
    %587 = vmatpush1.msra.mxu0 0.0
    %588 = vmatprep.subr.mxu0 0.0
    %589 = vmatpush1.msra.mxu0 0.0
    %590 = vmatprep.subr.mxu0 0.0
    %591 = vmatpush1.msra.mxu0 0.0
    %592 = vmatprep.subr.mxu0 0.0
    %593 = vmatpush1.msra.mxu0 0.0
    %594 = vmatprep.subr.mxu0 0.0
    %595 = vmatpush1.msra.mxu0 0.0
    %596 = vmatprep.subr.mxu0 0.0
    %597 = vmatpush1.msra.mxu0 0.0
    %598 = vmatprep.subr.mxu0 0.0
    %599 = vmatpush1.msra.mxu0 0.0
    %600 = vmatprep.subr.mxu0 0.0
    %601 = vmatpush1.msra.mxu0 0.0
    %602 = vmatprep.subr.mxu0 0.0
    %603 = vmatpush1.msra.mxu0 0.0
    %604 = vmatprep.subr.mxu0 0.0
    %605 = vmatpush1.msra.mxu0 0.0
    %606 = vmatprep.subr.mxu0 0.0
    %607 = vmatpush1.msra.mxu0 0.0
    %608 = vmatprep.subr.mxu0 0.0
    %609 = vmatpush1.msra.mxu0 0.0
    %610 = vmatprep.subr.mxu0 0.0
    %611 = vmatpush1.msra.mxu0 0.0
    %612 = vmatprep.subr.mxu0 0.0
    %613 = vmatpush1.msra.mxu0 0.0
    %614 = vmatprep.subr.mxu0 0.0
    %615 = vmatpush1.msra.mxu0 0.0
    %616 = vmatprep.subr.mxu0 0.0
    %617 = vmatpush1.msra.mxu0 0.0
    %618 = vmatprep.mubr.f32.mxu0 0.0
    %619 = vmatmul.mubr.f32.gmra.mrb[0].mxu0 %v546
    %v620 = vpop.f32.mrb[0].mxu0
    %v621 = vadd.f32 0.0, %v620
    %v622 = vpop.f32.mrb[0].mxu0
    %623 = vmatprep.mubr.f32.mxu0 0.0
    %624 = vmatmul.mubr.f32.gmra.mrb[0].mxu0 %v548
    %v625 = vpop.f32.mrb[0].mxu0
    %v626 = vadd.f32 0.0, %v625
    %v627 = vpop.f32.mrb[0].mxu0
    %628 = vmatprep.mubr.f32.mxu0 0.0
    %629 = vmatmul.mubr.f32.gmra.mrb[0].mxu0 %v550
    %v630 = vpop.f32.mrb[0].mxu0
    %v631 = vadd.f32 0.0, %v630
    %v632 = vpop.f32.mrb[0].mxu0
    %633 = vmatprep.mubr.f32.mxu0 0.0
    %634 = vmatmul.mubr.f32.gmra.mrb[0].mxu0 %v552
    %v635 = vpop.f32.mrb[0].mxu0
    %v636 = vadd.f32 0.0, %v635
    %v637 = vpop.f32.mrb[0].mxu0
    %638 = vdwg.mxu0
    %v639 = vadd.f32 %v529, %v621
    %v640 = vadd.f32 %v530, %v626
    %v641 = vadd.f32 %v531, %v631
    %v642 = vadd.f32 %v532, %v636
    %vm643 = vcmask 1042432
    %v644 = vrot.slane %v43, 5
    %v645 = vrot.slane %v44, 5
    %v646 = vsel %vm643, %v644, %v645
    %v647 = vrot.slane %v45, 5
    %v648 = vrot.slane %v46, 5
    %v649 = vsel %vm643, %v647, %v648
    %v650 = vrot.slane %v47, 5
    %v651 = vrot.slane %v48, 5
    %v652 = vsel %vm643, %v650, %v651
    %v653 = vrot.slane %v49, 5
    %v654 = vrot.slane %v50, 5
    %v655 = vsel %vm643, %v653, %v654
    %v656 = vsel %vm126, %v646, 0
    %v658 = vsel %vm126, %v649, 0
    %v660 = vsel %vm126, %v652, 0
    %v662 = vsel %vm126, %v655, 0
    %664 = vmatprep.subr.mxu0 0.0
    %665 = vmatpush1.msra.mxu0 %v81
    %666 = vmatprep.subr.mxu0 0.0
    %667 = vmatpush1.msra.mxu0 %v82
    %668 = vmatprep.subr.mxu0 0.0
    %669 = vmatpush1.msra.mxu0 %v83
    %670 = vmatprep.subr.mxu0 0.0
    %671 = vmatpush1.msra.mxu0 %v84
    %672 = vmatprep.subr.mxu0 0.0
    %673 = vmatpush1.msra.mxu0 %v85
    %674 = vmatprep.subr.mxu0 0.0
    %675 = vmatpush1.msra.mxu0 %v86
    %676 = vmatprep.subr.mxu0 0.0
    %677 = vmatpush1.msra.mxu0 0.0
    %678 = vmatprep.subr.mxu0 0.0
    %679 = vmatpush1.msra.mxu0 0.0
    %680 = vmatprep.subr.mxu0 0.0
    %681 = vmatpush1.msra.mxu0 0.0
    %682 = vmatprep.subr.mxu0 0.0
    %683 = vmatpush1.msra.mxu0 0.0
    %684 = vmatprep.subr.mxu0 0.0
    %685 = vmatpush1.msra.mxu0 0.0
    %686 = vmatprep.subr.mxu0 0.0
    %687 = vmatpush1.msra.mxu0 0.0
    %688 = vmatprep.subr.mxu0 0.0
    %689 = vmatpush1.msra.mxu0 0.0
    %690 = vmatprep.subr.mxu0 0.0
    %691 = vmatpush1.msra.mxu0 0.0
    %692 = vmatprep.subr.mxu0 0.0
    %693 = vmatpush1.msra.mxu0 0.0
    %694 = vmatprep.subr.mxu0 0.0
    %695 = vmatpush1.msra.mxu0 0.0
    %696 = vmatprep.subr.mxu0 0.0
    %697 = vmatpush1.msra.mxu0 0.0
    %698 = vmatprep.subr.mxu0 0.0
    %699 = vmatpush1.msra.mxu0 0.0
    %700 = vmatprep.subr.mxu0 0.0
    %701 = vmatpush1.msra.mxu0 0.0
    %702 = vmatprep.subr.mxu0 0.0
    %703 = vmatpush1.msra.mxu0 0.0
    %704 = vmatprep.subr.mxu0 0.0
    %705 = vmatpush1.msra.mxu0 0.0
    %706 = vmatprep.subr.mxu0 0.0
    %707 = vmatpush1.msra.mxu0 0.0
    %708 = vmatprep.subr.mxu0 0.0
    %709 = vmatpush1.msra.mxu0 0.0
    %710 = vmatprep.subr.mxu0 0.0
    %711 = vmatpush1.msra.mxu0 0.0
    %712 = vmatprep.subr.mxu0 0.0
    %713 = vmatpush1.msra.mxu0 0.0
    %714 = vmatprep.subr.mxu0 0.0
    %715 = vmatpush1.msra.mxu0 0.0
    %716 = vmatprep.subr.mxu0 0.0
    %717 = vmatpush1.msra.mxu0 0.0
    %718 = vmatprep.subr.mxu0 0.0
    %719 = vmatpush1.msra.mxu0 0.0
    %720 = vmatprep.subr.mxu0 0.0
    %721 = vmatpush1.msra.mxu0 0.0
    %722 = vmatprep.subr.mxu0 0.0
    %723 = vmatpush1.msra.mxu0 0.0
    %724 = vmatprep.subr.mxu0 0.0
    %725 = vmatpush1.msra.mxu0 0.0
    %726 = vmatprep.subr.mxu0 0.0
    %727 = vmatpush1.msra.mxu0 0.0
    %728 = vmatprep.mubr.f32.mxu0 0.0
    %729 = vmatmul.mubr.f32.gmra.mrb[0].mxu0 %v656
    %v730 = vpop.f32.mrb[0].mxu0
    %v731 = vadd.f32 0.0, %v730
    %v732 = vpop.f32.mrb[0].mxu0
    %733 = vmatprep.mubr.f32.mxu0 0.0
    %734 = vmatmul.mubr.f32.gmra.mrb[0].mxu0 %v658
    %v735 = vpop.f32.mrb[0].mxu0
    %v736 = vadd.f32 0.0, %v735
    %v737 = vpop.f32.mrb[0].mxu0
    %738 = vmatprep.mubr.f32.mxu0 0.0
    %739 = vmatmul.mubr.f32.gmra.mrb[0].mxu0 %v660
    %v740 = vpop.f32.mrb[0].mxu0
    %v741 = vadd.f32 0.0, %v740
    %v742 = vpop.f32.mrb[0].mxu0
    %743 = vmatprep.mubr.f32.mxu0 0.0
    %744 = vmatmul.mubr.f32.gmra.mrb[0].mxu0 %v662
    %v745 = vpop.f32.mrb[0].mxu0
    %v746 = vadd.f32 0.0, %v745
    %v747 = vpop.f32.mrb[0].mxu0
    %748 = vdwg.mxu0
    %v749 = vadd.f32 %v639, %v731
    %v750 = vadd.f32 %v640, %v736
    %v751 = vadd.f32 %v641, %v741
    %v752 = vadd.f32 %v642, %v746
    %vm753 = vcmask 1041408
    %v754 = vrot.slane %v43, 6
    %v755 = vrot.slane %v44, 6
    %v756 = vsel %vm753, %v754, %v755
    %v757 = vrot.slane %v45, 6
    %v758 = vrot.slane %v46, 6
    %v759 = vsel %vm753, %v757, %v758
    %v760 = vrot.slane %v47, 6
    %v761 = vrot.slane %v48, 6
    %v762 = vsel %vm753, %v760, %v761
    %v763 = vrot.slane %v49, 6
    %v764 = vrot.slane %v50, 6
    %v765 = vsel %vm753, %v763, %v764
    %v766 = vsel %vm126, %v756, 0
    %v768 = vsel %vm126, %v759, 0
    %v770 = vsel %vm126, %v762, 0
    %v772 = vsel %vm126, %v765, 0
    %774 = vmatprep.subr.mxu0 0.0
    %775 = vmatpush1.msra.mxu0 %v87
    %776 = vmatprep.subr.mxu0 0.0
    %777 = vmatpush1.msra.mxu0 %v88
    %778 = vmatprep.subr.mxu0 0.0
    %779 = vmatpush1.msra.mxu0 %v89
    %780 = vmatprep.subr.mxu0 0.0
    %781 = vmatpush1.msra.mxu0 %v90
    %782 = vmatprep.subr.mxu0 0.0
    %783 = vmatpush1.msra.mxu0 %v91
    %784 = vmatprep.subr.mxu0 0.0
    %785 = vmatpush1.msra.mxu0 %v92
    %786 = vmatprep.subr.mxu0 0.0
    %787 = vmatpush1.msra.mxu0 0.0
    %788 = vmatprep.subr.mxu0 0.0
    %789 = vmatpush1.msra.mxu0 0.0
    %790 = vmatprep.subr.mxu0 0.0
    %791 = vmatpush1.msra.mxu0 0.0
    %792 = vmatprep.subr.mxu0 0.0
    %793 = vmatpush1.msra.mxu0 0.0
    %794 = vmatprep.subr.mxu0 0.0
    %795 = vmatpush1.msra.mxu0 0.0
    %796 = vmatprep.subr.mxu0 0.0
    %797 = vmatpush1.msra.mxu0 0.0
    %798 = vmatprep.subr.mxu0 0.0
    %799 = vmatpush1.msra.mxu0 0.0
    %800 = vmatprep.subr.mxu0 0.0
    %801 = vmatpush1.msra.mxu0 0.0
    %802 = vmatprep.subr.mxu0 0.0
    %803 = vmatpush1.msra.mxu0 0.0
    %804 = vmatprep.subr.mxu0 0.0
    %805 = vmatpush1.msra.mxu0 0.0
    %806 = vmatprep.subr.mxu0 0.0
    %807 = vmatpush1.msra.mxu0 0.0
    %808 = vmatprep.subr.mxu0 0.0
    %809 = vmatpush1.msra.mxu0 0.0
    %810 = vmatprep.subr.mxu0 0.0
    %811 = vmatpush1.msra.mxu0 0.0
    %812 = vmatprep.subr.mxu0 0.0
    %813 = vmatpush1.msra.mxu0 0.0
    %814 = vmatprep.subr.mxu0 0.0
    %815 = vmatpush1.msra.mxu0 0.0
    %816 = vmatprep.subr.mxu0 0.0
    %817 = vmatpush1.msra.mxu0 0.0
    %818 = vmatprep.subr.mxu0 0.0
    %819 = vmatpush1.msra.mxu0 0.0
    %820 = vmatprep.subr.mxu0 0.0
    %821 = vmatpush1.msra.mxu0 0.0
    %822 = vmatprep.subr.mxu0 0.0
    %823 = vmatpush1.msra.mxu0 0.0
    %824 = vmatprep.subr.mxu0 0.0
    %825 = vmatpush1.msra.mxu0 0.0
    %826 = vmatprep.subr.mxu0 0.0
    %827 = vmatpush1.msra.mxu0 0.0
    %828 = vmatprep.subr.mxu0 0.0
    %829 = vmatpush1.msra.mxu0 0.0
    %830 = vmatprep.subr.mxu0 0.0
    %831 = vmatpush1.msra.mxu0 0.0
    %832 = vmatprep.subr.mxu0 0.0
    %833 = vmatpush1.msra.mxu0 0.0
    %834 = vmatprep.subr.mxu0 0.0
    %835 = vmatpush1.msra.mxu0 0.0
    %836 = vmatprep.subr.mxu0 0.0
    %837 = vmatpush1.msra.mxu0 0.0
    %838 = vmatprep.mubr.f32.mxu0 0.0
    %839 = vmatmul.mubr.f32.gmra.mrb[0].mxu0 %v766
    %v840 = vpop.f32.mrb[0].mxu0
    %v841 = vadd.f32 0.0, %v840
    %v842 = vpop.f32.mrb[0].mxu0
    %843 = vmatprep.mubr.f32.mxu0 0.0
    %844 = vmatmul.mubr.f32.gmra.mrb[0].mxu0 %v768
    %v845 = vpop.f32.mrb[0].mxu0
    %v846 = vadd.f32 0.0, %v845
    %v847 = vpop.f32.mrb[0].mxu0
    %848 = vmatprep.mubr.f32.mxu0 0.0
    %849 = vmatmul.mubr.f32.gmra.mrb[0].mxu0 %v770
    %v850 = vpop.f32.mrb[0].mxu0
    %v851 = vadd.f32 0.0, %v850
    %v852 = vpop.f32.mrb[0].mxu0
    %853 = vmatprep.mubr.f32.mxu0 0.0
    %854 = vmatmul.mubr.f32.gmra.mrb[0].mxu0 %v772
    %v855 = vpop.f32.mrb[0].mxu0
    %v856 = vadd.f32 0.0, %v855
    %v857 = vpop.f32.mrb[0].mxu0
    %858 = vdwg.mxu0
    %v859 = vadd.f32 %v749, %v841
    %v860 = vadd.f32 %v750, %v846
    %v861 = vadd.f32 %v751, %v851
    %v862 = vadd.f32 %v752, %v856
    %vm863 = vcmask 1040384
    %v864 = vrot.slane %v43, 7
    %v865 = vrot.slane %v44, 7
    %v866 = vsel %vm863, %v864, %v865
    %v867 = vrot.slane %v45, 7
    %v868 = vrot.slane %v46, 7
    %v869 = vsel %vm863, %v867, %v868
    %v870 = vrot.slane %v47, 7
    %v871 = vrot.slane %v48, 7
    %v872 = vsel %vm863, %v870, %v871
    %v873 = vrot.slane %v49, 7
    %v874 = vrot.slane %v50, 7
    %v875 = vsel %vm863, %v873, %v874
    %v876 = vsel %vm126, %v866, 0
    %v878 = vsel %vm126, %v869, 0
    %v880 = vsel %vm126, %v872, 0
    %v882 = vsel %vm126, %v875, 0
    %884 = vmatprep.subr.mxu0 0.0
    %885 = vmatpush1.msra.mxu0 %v93
    %886 = vmatprep.subr.mxu0 0.0
    %887 = vmatpush1.msra.mxu0 %v94
    %888 = vmatprep.subr.mxu0 0.0
    %889 = vmatpush1.msra.mxu0 %v95
    %890 = vmatprep.subr.mxu0 0.0
    %891 = vmatpush1.msra.mxu0 %v96
    %892 = vmatprep.subr.mxu0 0.0
    %893 = vmatpush1.msra.mxu0 %v97
    %894 = vmatprep.subr.mxu0 0.0
    %895 = vmatpush1.msra.mxu0 %v98
    %896 = vmatprep.subr.mxu0 0.0
    %897 = vmatpush1.msra.mxu0 0.0
    %898 = vmatprep.subr.mxu0 0.0
    %899 = vmatpush1.msra.mxu0 0.0
    %900 = vmatprep.subr.mxu0 0.0
    %901 = vmatpush1.msra.mxu0 0.0
    %902 = vmatprep.subr.mxu0 0.0
    %903 = vmatpush1.msra.mxu0 0.0
    %904 = vmatprep.subr.mxu0 0.0
    %905 = vmatpush1.msra.mxu0 0.0
    %906 = vmatprep.subr.mxu0 0.0
    %907 = vmatpush1.msra.mxu0 0.0
    %908 = vmatprep.subr.mxu0 0.0
    %909 = vmatpush1.msra.mxu0 0.0
    %910 = vmatprep.subr.mxu0 0.0
    %911 = vmatpush1.msra.mxu0 0.0
    %912 = vmatprep.subr.mxu0 0.0
    %913 = vmatpush1.msra.mxu0 0.0
    %914 = vmatprep.subr.mxu0 0.0
    %915 = vmatpush1.msra.mxu0 0.0
    %916 = vmatprep.subr.mxu0 0.0
    %917 = vmatpush1.msra.mxu0 0.0
    %918 = vmatprep.subr.mxu0 0.0
    %919 = vmatpush1.msra.mxu0 0.0
    %920 = vmatprep.subr.mxu0 0.0
    %921 = vmatpush1.msra.mxu0 0.0
    %922 = vmatprep.subr.mxu0 0.0
    %923 = vmatpush1.msra.mxu0 0.0
    %924 = vmatprep.subr.mxu0 0.0
    %925 = vmatpush1.msra.mxu0 0.0
    %926 = vmatprep.subr.mxu0 0.0
    %927 = vmatpush1.msra.mxu0 0.0
    %928 = vmatprep.subr.mxu0 0.0
    %929 = vmatpush1.msra.mxu0 0.0
    %930 = vmatprep.subr.mxu0 0.0
    %931 = vmatpush1.msra.mxu0 0.0
    %932 = vmatprep.subr.mxu0 0.0
    %933 = vmatpush1.msra.mxu0 0.0
    %934 = vmatprep.subr.mxu0 0.0
    %935 = vmatpush1.msra.mxu0 0.0
    %936 = vmatprep.subr.mxu0 0.0
    %937 = vmatpush1.msra.mxu0 0.0
    %938 = vmatprep.subr.mxu0 0.0
    %939 = vmatpush1.msra.mxu0 0.0
    %940 = vmatprep.subr.mxu0 0.0
    %941 = vmatpush1.msra.mxu0 0.0
    %942 = vmatprep.subr.mxu0 0.0
    %943 = vmatpush1.msra.mxu0 0.0
    %944 = vmatprep.subr.mxu0 0.0
    %945 = vmatpush1.msra.mxu0 0.0
    %946 = vmatprep.subr.mxu0 0.0
    %947 = vmatpush1.msra.mxu0 0.0
    %948 = vmatprep.mubr.f32.mxu0 0.0
    %949 = vmatmul.mubr.f32.gmra.mrb[0].mxu0 %v876
    %v950 = vpop.f32.mrb[0].mxu0
    %v951 = vadd.f32 0.0, %v950
    %v952 = vpop.f32.mrb[0].mxu0
    %953 = vmatprep.mubr.f32.mxu0 0.0
    %954 = vmatmul.mubr.f32.gmra.mrb[0].mxu0 %v878
    %v955 = vpop.f32.mrb[0].mxu0
    %v956 = vadd.f32 0.0, %v955
    %v957 = vpop.f32.mrb[0].mxu0
    %958 = vmatprep.mubr.f32.mxu0 0.0
    %959 = vmatmul.mubr.f32.gmra.mrb[0].mxu0 %v880
    %v960 = vpop.f32.mrb[0].mxu0
    %v961 = vadd.f32 0.0, %v960
    %v962 = vpop.f32.mrb[0].mxu0
    %963 = vmatprep.mubr.f32.mxu0 0.0
    %964 = vmatmul.mubr.f32.gmra.mrb[0].mxu0 %v882
    %v965 = vpop.f32.mrb[0].mxu0
    %v966 = vadd.f32 0.0, %v965
    %v967 = vpop.f32.mrb[0].mxu0
    %968 = vdwg.mxu0
    %v969 = vadd.f32 %v859, %v951
    %v970 = vadd.f32 %v860, %v956
    %v971 = vadd.f32 %v861, %v961
    %v972 = vadd.f32 %v862, %v966
    %v973 = vsel %vm126, %v44, 0
    %v975 = vsel %vm126, %v46, 0
    %v977 = vsel %vm126, %v48, 0
    %v979 = vsel %vm126, %v50, 0
    %981 = vmatprep.subr.mxu0 0.0
    %982 = vmatpush1.msra.mxu0 %v99
    %983 = vmatprep.subr.mxu0 0.0
    %984 = vmatpush1.msra.mxu0 %v100
    %985 = vmatprep.subr.mxu0 0.0
    %986 = vmatpush1.msra.mxu0 %v101
    %987 = vmatprep.subr.mxu0 0.0
    %988 = vmatpush1.msra.mxu0 %v102
    %989 = vmatprep.subr.mxu0 0.0
    %990 = vmatpush1.msra.mxu0 %v103
    %991 = vmatprep.subr.mxu0 0.0
    %992 = vmatpush1.msra.mxu0 %v104
    %993 = vmatprep.subr.mxu0 0.0
    %994 = vmatpush1.msra.mxu0 0.0
    %995 = vmatprep.subr.mxu0 0.0
    %996 = vmatpush1.msra.mxu0 0.0
    %997 = vmatprep.subr.mxu0 0.0
    %998 = vmatpush1.msra.mxu0 0.0
    %999 = vmatprep.subr.mxu0 0.0
    %1000 = vmatpush1.msra.mxu0 0.0
    %1001 = vmatprep.subr.mxu0 0.0
    %1002 = vmatpush1.msra.mxu0 0.0
    %1003 = vmatprep.subr.mxu0 0.0
    %1004 = vmatpush1.msra.mxu0 0.0
    %1005 = vmatprep.subr.mxu0 0.0
    %1006 = vmatpush1.msra.mxu0 0.0
    %1007 = vmatprep.subr.mxu0 0.0
    %1008 = vmatpush1.msra.mxu0 0.0
    %1009 = vmatprep.subr.mxu0 0.0
    %1010 = vmatpush1.msra.mxu0 0.0
    %1011 = vmatprep.subr.mxu0 0.0
    %1012 = vmatpush1.msra.mxu0 0.0
    %1013 = vmatprep.subr.mxu0 0.0
    %1014 = vmatpush1.msra.mxu0 0.0
    %1015 = vmatprep.subr.mxu0 0.0
    %1016 = vmatpush1.msra.mxu0 0.0
    %1017 = vmatprep.subr.mxu0 0.0
    %1018 = vmatpush1.msra.mxu0 0.0
    %1019 = vmatprep.subr.mxu0 0.0
    %1020 = vmatpush1.msra.mxu0 0.0
    %1021 = vmatprep.subr.mxu0 0.0
    %1022 = vmatpush1.msra.mxu0 0.0
    %1023 = vmatprep.subr.mxu0 0.0
    %1024 = vmatpush1.msra.mxu0 0.0
    %1025 = vmatprep.subr.mxu0 0.0
    %1026 = vmatpush1.msra.mxu0 0.0
    %1027 = vmatprep.subr.mxu0 0.0
    %1028 = vmatpush1.msra.mxu0 0.0
    %1029 = vmatprep.subr.mxu0 0.0
    %1030 = vmatpush1.msra.mxu0 0.0
    %1031 = vmatprep.subr.mxu0 0.0
    %1032 = vmatpush1.msra.mxu0 0.0
    %1033 = vmatprep.subr.mxu0 0.0
    %1034 = vmatpush1.msra.mxu0 0.0
    %1035 = vmatprep.subr.mxu0 0.0
    %1036 = vmatpush1.msra.mxu0 0.0
    %1037 = vmatprep.subr.mxu0 0.0
    %1038 = vmatpush1.msra.mxu0 0.0
    %1039 = vmatprep.subr.mxu0 0.0
    %1040 = vmatpush1.msra.mxu0 0.0
    %1041 = vmatprep.subr.mxu0 0.0
    %1042 = vmatpush1.msra.mxu0 0.0
    %1043 = vmatprep.subr.mxu0 0.0
    %1044 = vmatpush1.msra.mxu0 0.0
    %1045 = vmatprep.mubr.f32.mxu0 0.0
    %1046 = vmatmul.mubr.f32.gmra.mrb[0].mxu0 %v973
    %v1047 = vpop.f32.mrb[0].mxu0
    %v1048 = vadd.f32 0.0, %v1047
    %v1049 = vpop.f32.mrb[0].mxu0
    %1050 = vmatprep.mubr.f32.mxu0 0.0
    %1051 = vmatmul.mubr.f32.gmra.mrb[0].mxu0 %v975
    %v1052 = vpop.f32.mrb[0].mxu0
    %v1053 = vadd.f32 0.0, %v1052
    %v1054 = vpop.f32.mrb[0].mxu0
    %1055 = vmatprep.mubr.f32.mxu0 0.0
    %1056 = vmatmul.mubr.f32.gmra.mrb[0].mxu0 %v977
    %v1057 = vpop.f32.mrb[0].mxu0
    %v1058 = vadd.f32 0.0, %v1057
    %v1059 = vpop.f32.mrb[0].mxu0
    %1060 = vmatprep.mubr.f32.mxu0 0.0
    %1061 = vmatmul.mubr.f32.gmra.mrb[0].mxu0 %v979
    %v1062 = vpop.f32.mrb[0].mxu0
    %v1063 = vadd.f32 0.0, %v1062
    %v1064 = vpop.f32.mrb[0].mxu0
    %1065 = vdwg.mxu0
    %v1066 = vadd.f32 %v969, %v1048
    %v1067 = vadd.f32 %v970, %v1053
    %v1068 = vadd.f32 %v971, %v1058
    %v1069 = vadd.f32 %v972, %v1063
    %vm1070 = vcmask 64512
    %v1071 = vsel %vm1070, %v1066, 0.0
    %v1072 = vsel %vm1070, %v1067, 0.0
    %v1073 = vadd.f32 %v1071, %v1072
    %1074 = vadd.xlane.f32.xlu0 %v1073
    %v1075 = vpop.xlane.xlu0 %1074
    %v1076 = vrot.slane %v1075, 4
    %v1077 = vadd.f32 %v1075, %v1076
    %v1078 = vrot.slane %v1077, 2
    %v1079 = vadd.f32 %v1077, %v1078
    %v1080 = vrot.slane %v1079, 1
    %v1081 = vadd.f32 %v1079, %v1080
    %s1082 = vtos %v1081
    %v1083 = vstv %s1082
    %v1084 = vmul.f32 %v1083, 0.0078125
    %v1085 = vsub.f32 %v1066, %v1084
    %v1086 = vsub.f32 %v1067, %v1084
    %v1087 = vmul.f32 %v1085, %v1085
    %v1088 = vmul.f32 %v1086, %v1086
    %v1089 = vsel %vm1070, %v1087, 0.0
    %v1090 = vsel %vm1070, %v1088, 0.0
    %v1091 = vadd.f32 %v1089, %v1090
    %1092 = vadd.xlane.f32.xlu0 %v1091
    %v1093 = vpop.xlane.xlu0 %1092
    %v1094 = vrot.slane %v1093, 4
    %v1095 = vadd.f32 %v1093, %v1094
    %v1096 = vrot.slane %v1095, 2
    %v1097 = vadd.f32 %v1095, %v1096
    %v1098 = vrot.slane %v1097, 1
    %v1099 = vadd.f32 %v1097, %v1098
    %s1100 = vtos %v1099
    %v1101 = vstv %s1100
    %v1102 = vmul.f32 %v1101, 0.0078125
    %v1103 = vadd.f32 %v1102, 1e-05
    %v1104 = vrsqrt.pop %v1103
    %v1105 = vmul.f32 %v1085, %v1104
    %v1106 = vmul.f32 %v1086, %v1104
    %s1107 = sld [smem:[#allocation2]]
    %v1108 = vstv %s1107
    %v1109 = vmul.f32 %v1105, %v1108
    %v1110 = vmul.f32 %v1106, %v1108
    %s1111 = sld [smem:[#allocation5]]
    %v1112 = vstv %s1111
    %v1113 = vadd.f32 %v1109, %v1112
    %v1114 = vadd.f32 %v1110, %v1112
    %v1115 = vmax.f32 %v1113, -1.0
    %v1116 = vmax.f32 %v1114, -1.0
    %v1117 = vmin.f32 %v1115, 1.0
    %v1118 = vmin.f32 %v1116, 1.0
    %v1119 = vsel %vm1070, %v1068, 0.0
    %v1120 = vsel %vm1070, %v1069, 0.0
    %v1121 = vadd.f32 %v1119, %v1120
    %1122 = vadd.xlane.f32.xlu0 %v1121
    %v1123 = vpop.xlane.xlu0 %1122
    %v1124 = vrot.slane %v1123, 4
    %v1125 = vadd.f32 %v1123, %v1124
    %v1126 = vrot.slane %v1125, 2
    %v1127 = vadd.f32 %v1125, %v1126
    %v1128 = vrot.slane %v1127, 1
    %v1129 = vadd.f32 %v1127, %v1128
    %s1130 = vtos %v1129
    %v1131 = vstv %s1130
    %v1132 = vmul.f32 %v1131, 0.0078125
    %v1133 = vsub.f32 %v1068, %v1132
    %v1134 = vsub.f32 %v1069, %v1132
    %v1135 = vmul.f32 %v1133, %v1133
    %v1136 = vmul.f32 %v1134, %v1134
    %v1137 = vsel %vm1070, %v1135, 0.0
    %v1138 = vsel %vm1070, %v1136, 0.0
    %v1139 = vadd.f32 %v1137, %v1138
    %1140 = vadd.xlane.f32.xlu0 %v1139
    %v1141 = vpop.xlane.xlu0 %1140
    %v1142 = vrot.slane %v1141, 4
    %v1143 = vadd.f32 %v1141, %v1142
    %v1144 = vrot.slane %v1143, 2
    %v1145 = vadd.f32 %v1143, %v1144
    %v1146 = vrot.slane %v1145, 1
    %v1147 = vadd.f32 %v1145, %v1146
    %s1148 = vtos %v1147
    %v1149 = vstv %s1148
    %v1150 = vmul.f32 %v1149, 0.0078125
    %v1151 = vadd.f32 %v1150, 1e-05
    %v1152 = vrsqrt.pop %v1151
    %v1153 = vmul.f32 %v1133, %v1152
    %v1154 = vmul.f32 %v1134, %v1152
    %v1155 = vmul.f32 %v1153, %v1108
    %v1156 = vmul.f32 %v1154, %v1108
    %v1157 = vadd.f32 %v1155, %v1112
    %v1158 = vadd.f32 %v1156, %v1112
    %v1159 = vmax.f32 %v1157, -1.0
    %v1160 = vmax.f32 %v1158, -1.0
    %v1161 = vmin.f32 %v1159, 1.0
    %v1162 = vmin.f32 %v1160, 1.0
    %v1163 = vsub.f32 %v1117, %v1161
    %v1164 = vsub.f32 %v1118, %v1162
    %1165 = vst.msk [vmem:[#allocation7] sm:$0xff] %vm1070, %v1163
    %1166 = vst.msk [vmem:[#allocation7 + $0x18] sm:$0xff] %vm1070, %v1164
    %1169 = vrot.lane.b32.xlu0 %v1066, 120
    %v1170 = vpop.permute.xlu0 %1169
    %1171 = vrot.lane.b32.xlu0 %v1067, 120
    %v1172 = vpop.permute.xlu0 %1171
    %v1175 = vsel %vm1070, %v1170, 0.0
    %v1176 = vsel %vm1070, %v1172, 0.0
    %v1177 = vadd.f32 %v1175, %v1176
    %1178 = vadd.xlane.f32.xlu0 %v1177
    %v1179 = vpop.xlane.xlu0 %1178
    %v1180 = vrot.slane %v1179, 4
    %v1181 = vadd.f32 %v1179, %v1180
    %v1182 = vrot.slane %v1181, 2
    %v1183 = vadd.f32 %v1181, %v1182
    %v1184 = vrot.slane %v1183, 1
    %v1185 = vadd.f32 %v1183, %v1184
    %s1186 = vtos %v1185
    %v1187 = vstv %s1186
    %v1188 = vmul.f32 %v1187, 0.0078125
    %v1189 = vsub.f32 %v1066, %v1188
    %v1190 = vsub.f32 %v1067, %v1188
    %v1191 = vmul.f32 %v1189, %v1189
    %v1192 = vmul.f32 %v1190, %v1190
    %1195 = vrot.lane.b32.xlu0 %v1191, 120
    %v1196 = vpop.permute.xlu0 %1195
    %1197 = vrot.lane.b32.xlu0 %v1192, 120
    %v1198 = vpop.permute.xlu0 %1197
    %v1201 = vsel %vm1070, %v1196, 0.0
    %v1202 = vsel %vm1070, %v1198, 0.0
    %v1203 = vadd.f32 %v1201, %v1202
    %1204 = vadd.xlane.f32.xlu0 %v1203
    %v1205 = vpop.xlane.xlu0 %1204
    %v1206 = vrot.slane %v1205, 4
    %v1207 = vadd.f32 %v1205, %v1206
    %v1208 = vrot.slane %v1207, 2
    %v1209 = vadd.f32 %v1207, %v1208
    %v1210 = vrot.slane %v1209, 1
    %v1211 = vadd.f32 %v1209, %v1210
    %s1212 = vtos %v1211
    %v1213 = vstv %s1212
    %v1214 = vmul.f32 %v1213, 0.0078125
    %v1215 = vadd.f32 %v1214, 1e-05
    %v1216 = vrsqrt.pop %v1215
    %v1217 = vmul.f32 %v1189, %v1216
    %v1218 = vmul.f32 %v1190, %v1216
    %s1219 = sld [smem:[#allocation2 + $0x1]]
    %v1220 = vstv %s1219
    %v1221 = vmul.f32 %v1217, %v1220
    %v1222 = vmul.f32 %v1218, %v1220
    %s1223 = sld [smem:[#allocation5 + $0x1]]
    %v1224 = vstv %s1223
    %v1225 = vadd.f32 %v1221, %v1224
    %v1226 = vadd.f32 %v1222, %v1224
    %v1227 = vmax.f32 %v1225, -1.0
    %v1228 = vmax.f32 %v1226, -1.0
    %v1229 = vmin.f32 %v1227, 1.0
    %v1230 = vmin.f32 %v1228, 1.0
    %1233 = vrot.lane.b32.xlu0 %v1068, 120
    %v1234 = vpop.permute.xlu0 %1233
    %1235 = vrot.lane.b32.xlu0 %v1069, 120
    %v1236 = vpop.permute.xlu0 %1235
    %v1239 = vsel %vm1070, %v1234, 0.0
    %v1240 = vsel %vm1070, %v1236, 0.0
    %v1241 = vadd.f32 %v1239, %v1240
    %1242 = vadd.xlane.f32.xlu0 %v1241
    %v1243 = vpop.xlane.xlu0 %1242
    %v1244 = vrot.slane %v1243, 4
    %v1245 = vadd.f32 %v1243, %v1244
    %v1246 = vrot.slane %v1245, 2
    %v1247 = vadd.f32 %v1245, %v1246
    %v1248 = vrot.slane %v1247, 1
    %v1249 = vadd.f32 %v1247, %v1248
    %s1250 = vtos %v1249
    %v1251 = vstv %s1250
    %v1252 = vmul.f32 %v1251, 0.0078125
    %v1253 = vsub.f32 %v1068, %v1252
    %v1254 = vsub.f32 %v1069, %v1252
    %v1255 = vmul.f32 %v1253, %v1253
    %v1256 = vmul.f32 %v1254, %v1254
    %1259 = vrot.lane.b32.xlu0 %v1255, 120
    %v1260 = vpop.permute.xlu0 %1259
    %1261 = vrot.lane.b32.xlu0 %v1256, 120
    %v1262 = vpop.permute.xlu0 %1261
    %v1265 = vsel %vm1070, %v1260, 0.0
    %v1266 = vsel %vm1070, %v1262, 0.0
    %v1267 = vadd.f32 %v1265, %v1266
    %1268 = vadd.xlane.f32.xlu0 %v1267
    %v1269 = vpop.xlane.xlu0 %1268
    %v1270 = vrot.slane %v1269, 4
    %v1271 = vadd.f32 %v1269, %v1270
    %v1272 = vrot.slane %v1271, 2
    %v1273 = vadd.f32 %v1271, %v1272
    %v1274 = vrot.slane %v1273, 1
    %v1275 = vadd.f32 %v1273, %v1274
    %s1276 = vtos %v1275
    %v1277 = vstv %s1276
    %v1278 = vmul.f32 %v1277, 0.0078125
    %v1279 = vadd.f32 %v1278, 1e-05
    %v1280 = vrsqrt.pop %v1279
    %v1281 = vmul.f32 %v1253, %v1280
    %v1282 = vmul.f32 %v1254, %v1280
    %v1283 = vmul.f32 %v1281, %v1220
    %v1284 = vmul.f32 %v1282, %v1220
    %v1285 = vadd.f32 %v1283, %v1224
    %v1286 = vadd.f32 %v1284, %v1224
    %v1287 = vmax.f32 %v1285, -1.0
    %v1288 = vmax.f32 %v1286, -1.0
    %v1289 = vmin.f32 %v1287, 1.0
    %v1290 = vmin.f32 %v1288, 1.0
    %v1291 = vsub.f32 %v1229, %v1289
    %v1292 = vsub.f32 %v1230, %v1290
    %1295 = vrot.lane.b32.xlu0 %v1291, 120
    %v1296 = vpop.permute.xlu0 %1295
    %1297 = vrot.lane.b32.xlu0 %v1292, 120
    %v1298 = vpop.permute.xlu0 %1297
    %s1301 = scalar_lea.vmem [#allocation7], 8
    %1302 = vst.msk [vmem:[%s1301] sm:$0xff] %vm1070, %v1296
    %1303 = vst.msk [vmem:[%s1301 + $0x18] sm:$0xff] %vm1070, %v1298
    %1304 = vrot.lane.b32.xlu0 %v1066, 112
    %v1305 = vpop.permute.xlu0 %1304
    %1306 = vrot.lane.b32.xlu0 %v1067, 112
    %v1307 = vpop.permute.xlu0 %1306
    %v1310 = vsel %vm1070, %v1305, 0.0
    %v1311 = vsel %vm1070, %v1307, 0.0
    %v1312 = vadd.f32 %v1310, %v1311
    %1313 = vadd.xlane.f32.xlu0 %v1312
    %v1314 = vpop.xlane.xlu0 %1313
    %v1315 = vrot.slane %v1314, 4
    %v1316 = vadd.f32 %v1314, %v1315
    %v1317 = vrot.slane %v1316, 2
    %v1318 = vadd.f32 %v1316, %v1317
    %v1319 = vrot.slane %v1318, 1
    %v1320 = vadd.f32 %v1318, %v1319
    %s1321 = vtos %v1320
    %v1322 = vstv %s1321
    %v1323 = vmul.f32 %v1322, 0.0078125
    %v1324 = vsub.f32 %v1066, %v1323
    %v1325 = vsub.f32 %v1067, %v1323
    %v1326 = vmul.f32 %v1324, %v1324
    %v1327 = vmul.f32 %v1325, %v1325
    %1330 = vrot.lane.b32.xlu0 %v1326, 112
    %v1331 = vpop.permute.xlu0 %1330
    %1332 = vrot.lane.b32.xlu0 %v1327, 112
    %v1333 = vpop.permute.xlu0 %1332
    %v1336 = vsel %vm1070, %v1331, 0.0
    %v1337 = vsel %vm1070, %v1333, 0.0
    %v1338 = vadd.f32 %v1336, %v1337
    %1339 = vadd.xlane.f32.xlu0 %v1338
    %v1340 = vpop.xlane.xlu0 %1339
    %v1341 = vrot.slane %v1340, 4
    %v1342 = vadd.f32 %v1340, %v1341
    %v1343 = vrot.slane %v1342, 2
    %v1344 = vadd.f32 %v1342, %v1343
    %v1345 = vrot.slane %v1344, 1
    %v1346 = vadd.f32 %v1344, %v1345
    %s1347 = vtos %v1346
    %v1348 = vstv %s1347
    %v1349 = vmul.f32 %v1348, 0.0078125
    %v1350 = vadd.f32 %v1349, 1e-05
    %v1351 = vrsqrt.pop %v1350
    %v1352 = vmul.f32 %v1324, %v1351
    %v1353 = vmul.f32 %v1325, %v1351
    %s1354 = sld [smem:[#allocation2 + $0x2]]
    %v1355 = vstv %s1354
    %v1356 = vmul.f32 %v1352, %v1355
    %v1357 = vmul.f32 %v1353, %v1355
    %s1358 = sld [smem:[#allocation5 + $0x2]]
    %v1359 = vstv %s1358
    %v1360 = vadd.f32 %v1356, %v1359
    %v1361 = vadd.f32 %v1357, %v1359
    %v1362 = vmax.f32 %v1360, -1.0
    %v1363 = vmax.f32 %v1361, -1.0
    %v1364 = vmin.f32 %v1362, 1.0
    %v1365 = vmin.f32 %v1363, 1.0
    %1366 = vrot.lane.b32.xlu0 %v1068, 112
    %v1367 = vpop.permute.xlu0 %1366
    %1368 = vrot.lane.b32.xlu0 %v1069, 112
    %v1369 = vpop.permute.xlu0 %1368
    %v1372 = vsel %vm1070, %v1367, 0.0
    %v1373 = vsel %vm1070, %v1369, 0.0
    %v1374 = vadd.f32 %v1372, %v1373
    %1375 = vadd.xlane.f32.xlu0 %v1374
    %v1376 = vpop.xlane.xlu0 %1375
    %v1377 = vrot.slane %v1376, 4
    %v1378 = vadd.f32 %v1376, %v1377
    %v1379 = vrot.slane %v1378, 2
    %v1380 = vadd.f32 %v1378, %v1379
    %v1381 = vrot.slane %v1380, 1
    %v1382 = vadd.f32 %v1380, %v1381
    %s1383 = vtos %v1382
    %v1384 = vstv %s1383
    %v1385 = vmul.f32 %v1384, 0.0078125
    %v1386 = vsub.f32 %v1068, %v1385
    %v1387 = vsub.f32 %v1069, %v1385
    %v1388 = vmul.f32 %v1386, %v1386
    %v1389 = vmul.f32 %v1387, %v1387
    %1392 = vrot.lane.b32.xlu0 %v1388, 112
    %v1393 = vpop.permute.xlu0 %1392
    %1394 = vrot.lane.b32.xlu0 %v1389, 112
    %v1395 = vpop.permute.xlu0 %1394
    %v1398 = vsel %vm1070, %v1393, 0.0
    %v1399 = vsel %vm1070, %v1395, 0.0
    %v1400 = vadd.f32 %v1398, %v1399
    %1401 = vadd.xlane.f32.xlu0 %v1400
    %v1402 = vpop.xlane.xlu0 %1401
    %v1403 = vrot.slane %v1402, 4
    %v1404 = vadd.f32 %v1402, %v1403
    %v1405 = vrot.slane %v1404, 2
    %v1406 = vadd.f32 %v1404, %v1405
    %v1407 = vrot.slane %v1406, 1
    %v1408 = vadd.f32 %v1406, %v1407
    %s1409 = vtos %v1408
    %v1410 = vstv %s1409
    %v1411 = vmul.f32 %v1410, 0.0078125
    %v1412 = vadd.f32 %v1411, 1e-05
    %v1413 = vrsqrt.pop %v1412
    %v1414 = vmul.f32 %v1386, %v1413
    %v1415 = vmul.f32 %v1387, %v1413
    %v1416 = vmul.f32 %v1414, %v1355
    %v1417 = vmul.f32 %v1415, %v1355
    %v1418 = vadd.f32 %v1416, %v1359
    %v1419 = vadd.f32 %v1417, %v1359
    %v1420 = vmax.f32 %v1418, -1.0
    %v1421 = vmax.f32 %v1419, -1.0
    %v1422 = vmin.f32 %v1420, 1.0
    %v1423 = vmin.f32 %v1421, 1.0
    %v1424 = vsub.f32 %v1364, %v1422
    %v1425 = vsub.f32 %v1365, %v1423
    %1428 = vrot.lane.b32.xlu0 %v1424, 112
    %v1429 = vpop.permute.xlu0 %1428
    %1430 = vrot.lane.b32.xlu0 %v1425, 112
    %v1431 = vpop.permute.xlu0 %1430
    %s1434 = scalar_lea.vmem [#allocation7], 16
    %1435 = vst.msk [vmem:[%s1434] sm:$0xff] %vm1070, %v1429
    %1436 = vst.msk [vmem:[%s1434 + $0x18] sm:$0xff] %vm1070, %v1431
    // Predicated region
    $region26: #{fingerprint_forward.1} parent=1 // pred_check
      _
    $region27: #{fingerprint_forward.1} parent=1 // pred_check_branch
      %1438 = sbr.rel (0) target = $region29
    $region28: #{fingerprint_forward.1} parent=1 // pred_region
      %s1440 = ssub.s32 768, 768
      %1441 = vsyncadd [#allocation3], %s1440
      %s1442 = sshll.u32 [#allocation7], 4
      %s1443 = int_to_ptr.vmem [resolvable:$true] %s1442
      %1448 = dma.vmem_to_hbm [thread:$0]  %s1443, 768, %s4, [#allocation3], 128, 128, 8
    $region29: #{fingerprint_forward.1} parent=1 // pred_fallthru
      _
    // Predicated region
    $region30: #{fingerprint_forward.1} parent=1 // pred_check
      _
    $region31: #{fingerprint_forward.1} parent=1 // pred_check_branch
      %1450 = sbr.rel (0) target = $region33
    $region32: #{fingerprint_forward.1} parent=1 // pred_region
      %1451 = dma.done [#allocation3], 768
    $region33: #{fingerprint_forward.1} parent=1 // pred_fallthru
      _
    %1452 = vsyncpa [#allocation3], 1
    %1453 = vsyncpa [#allocation4], 1
    %1454 = vsyncpa [#allocation6], 1

</llo_original>
